<compile_context>
chip_gen: v6e
topology: v6e:2x2x1
jax: 0.10.0
libtpu: 0.0.40
codegen_flags: <defaults>
</compile_context>

<pallas_src>
import functools

import jax
import jax.numpy as jnp
import numpy as np
from jax import lax
from jax.experimental import pallas as pl
from jax.experimental.pallas import tpu as pltpu

# Model configuration (ACR-style sub-modules).
CIN, NF, NL, K, SFB_F = 1, 8, 2, 3, 4     # in-ch, icnn filters, icnn layers, kernel, sfb filters
LRELU_SLOPE = 0.2


# ----------------------------------------------------------------------------
# Fused forward kernel: whole Wrapper.forward for B_TILE images per grid step.
# ----------------------------------------------------------------------------
def _fused_forward_kernel(xcol_ref, wbig_ref, bz_ref, coef_ref, o_ref, *,
                          H, W, NF, NL, BT, slope):
    LN = W * NF                  # 128 lanes : lane = w*NF + channel (lane-dense)
    M = BT * H                   # images stacked along sublanes (MXU M rows)
    CTR = (K * K // 2) * W       # im2col column offset of the centre patch

    def lrelu(v):
        return jnp.where(v > 0, v, slope * v)

    # ---- single x-side MXU dot: all x convs (+ biases via the ones column) ---
    xcol = xcol_ref[...]                                            # (M, 256) f32
    xr = jnp.dot(xcol, wbig_ref[...],
                 preferred_element_type=jnp.float32)                # (M, 512)

    # Hoisted per-image top/bottom row masks (handle kh shift across stacked
    # images and the roll wrap-around in one go).
    row = lax.broadcasted_iota(jnp.int32, (M, LN), 0)
    not_top = (row % H) != 0
    not_bot = (row % H) != (H - 1)

    # ---- ICNN: z kept entirely in vregs ------------------------------------
    z = lrelu(xr[:, 0:LN])                                          # layer-0 (biased)
    for l in range(NL):
        # vertical (kh) neighbours via sublane roll + boundary mask
        up = jnp.where(not_top, pltpu.roll(z, 1, 0), 0.0)           # z[r-1]
        dn = jnp.where(not_bot, pltpu.roll(z, M - 1, 0), 0.0)       # z[r+1]
        # 3 banded (block-tridiagonal) bf16 dots: kw folded into the weights
        zc = (jnp.dot(up.astype(jnp.bfloat16), bz_ref[l, 0],
                      preferred_element_type=jnp.float32)
              + jnp.dot(z.astype(jnp.bfloat16), bz_ref[l, 1],
                        preferred_element_type=jnp.float32)
              + jnp.dot(dn.astype(jnp.bfloat16), bz_ref[l, 2],
                        preferred_element_type=jnp.float32))
        z = lrelu(zc + xr[:, (l + 1) * LN:(l + 2) * LN])            # + biased x conv

    # ---- final conv + spatial sum == multiply-reduce with precomputed coef --
    s_icnn = jnp.sum(z * coef_ref[...])

    # ---- SFB: L1 of filter-bank responses (padded channels are exact zeros) -
    s_sfb = jnp.sum(jnp.abs(xr[:, (NL + 1) * LN:(NL + 2) * LN]))

    # ---- L2: ||x||^2 (centre im2col columns == the unpadded image) ----------
    xc = xcol[:, CTR:CTR + W]
    s_l2 = jnp.sum(xc * xc)

    # ---- pack the three block sums into one aligned (8,128) tile ------------
    li = lax.broadcasted_iota(jnp.int32, (8, 128), 1)
    ri = lax.broadcasted_iota(jnp.int32, (8, 128), 0)
    vals = jnp.where(li == 0, s_icnn,
                     jnp.where(li == 1, s_sfb,
                               jnp.where(li == 2, s_l2, 0.0)))
    o_ref[0] = jnp.where(ri == 0, vals, 0.0)


# ----------------------------------------------------------------------------
# Wrapper-side weight preparation (one-time, cheap XLA glue)
# ----------------------------------------------------------------------------
def _blockdiag_x(w, width):
    """(K,K,1,Cout) conv weight -> im2col weight (K*K*width, width*Cout)."""
    kh, kw, cin, cout = w.shape
    assert cin == 1
    eye = jnp.eye(width, dtype=jnp.float32)
    wk = w.reshape(kh * kw, cout).astype(jnp.float32)               # (K*K, Cout)
    bd = jnp.einsum('pq,ko->kpqo', eye, wk)                         # (K*K, Win, Wout, Cout)
    return bd.reshape(kh * kw * width, width * cout)


def _banded_z(w, width):
    """(K,K,Cin,Cout) -> (K, width*Cin, width*Cout) block-tridiagonal (kw folded)."""
    Kh, Kw, cin, cout = w.shape
    win = jnp.arange(width)[:, None]
    wout = jnp.arange(width)[None, :]
    kidx = win - wout + (Kw // 2)                                   # kw = w_in - w_out + 1
    valid = (kidx >= 0) & (kidx < Kw)
    kclip = jnp.clip(kidx, 0, Kw - 1)
    wk = w.astype(jnp.float32)[:, kclip]                            # (Kh, W, W, Cin, Cout)
    wk = jnp.where(valid[None, :, :, None, None], wk, 0.0)
    bd = jnp.transpose(wk, (0, 1, 3, 2, 4))                         # (Kh, Win, Cin, Wout, Cout)
    return bd.reshape(Kh, width * cin, width * cout)


def _final_coef(w_final, H, W):
    """coef s.t. sum(conv(z, w_final, SAME)) == sum(z * coef)."""
    wf = w_final[..., 0].astype(jnp.float32)                        # (K,K,NF)
    i = jnp.arange(H)[:, None, None, None]
    j = jnp.arange(W)[None, :, None, None]
    kh = jnp.arange(K)[None, None, :, None]
    kw = jnp.arange(K)[None, None, None, :]
    vh = (i - kh + 1 >= 0) & (i - kh + 1 <= H - 1)
    vw = (j - kw + 1 >= 0) & (j - kw + 1 <= W - 1)
    valid = (vh & vw).astype(jnp.float32)                           # (H,W,K,K)
    coef = jnp.einsum('ijab,abc->ijc', valid, wf)                   # (H,W,NF)
    return coef.reshape(H, W * NF)


def _pick_b_tile(B, max_tile=8):
    """Largest divisor of B <= max_tile, preferring a grid of >= 2 steps
    (so v7x can shard across both TensorCores)."""
    divs = [t for t in range(1, min(B, max_tile) + 1) if B % t == 0]
    pref = [t for t in divs if B // t >= 2]
    return max(pref) if pref else max(divs)


# ----------------------------------------------------------------------------
# Wrapper.forward — Pallas version (single fused kernel)
# ----------------------------------------------------------------------------
def wrapper_forward(params, x_nchw):
    x = jnp.transpose(x_nchw, (0, 2, 3, 1)).astype(jnp.float32)     # NCHW -> NHWC
    B, H, W, Cin = x.shape
    assert Cin == CIN == 1 and W * NF == 128, "lane-dense layout assumes W*NF==128"
    KK = K * K
    LN = W * NF
    NOUT = (NL + 2) * LN                                            # 3 icnn x-convs + sfb = 512
    KCOL = KK * W + 1                                               # 9 patches + ones column
    KPAD = ((KCOL + 127) // 128) * 128                              # pad K to 256 (aligned)

    BT = _pick_b_tile(B)
    G = B // BT
    M = BT * H

    # ---- im2col x slab (lane-dense): 9 shifted patches | ones | zero pad ----
    xpad = jnp.pad(x[..., 0], ((0, 0), (1, 1), (1, 1)))
    patches = [xpad[:, kh:kh + H, kw:kw + W]
               for kh in range(K) for kw in range(K)]               # 9 x (B,H,W)
    xcol = jnp.concatenate(
        patches + [jnp.ones((B, H, 1), jnp.float32),
                   jnp.zeros((B, H, KPAD - KCOL), jnp.float32)],
        axis=2).reshape(B * H, KPAD)                                # (B*H, 256)

    # ---- one concatenated x-side weight: [wx0 | wx1 | wx2 | sfb(+pad)] ------
    xw_blocks = [_blockdiag_x(params["wx"][l], W) for l in range(NL + 1)]
    sfb_w = jnp.pad(params["w_sfb"],
                    ((0, 0), (0, 0), (0, 0), (0, NF - SFB_F)))      # pad Cout 4 -> 8
    xw_blocks.append(_blockdiag_x(sfb_w, W))
    top = jnp.concatenate(xw_blocks, axis=1)                        # (KK*W, 512)
    bias_row = jnp.concatenate(
        [jnp.tile(params["bx"][l].astype(jnp.float32), W) for l in range(NL + 1)]
        + [jnp.zeros((LN,), jnp.float32)])[None, :]                 # (1, 512)
    wbig = jnp.concatenate(
        [top, bias_row, jnp.zeros((KPAD - KCOL, NOUT), jnp.float32)],
        axis=0)                                                     # (256, 512) f32

    # ---- block-tridiagonal z weights (bf16 for the MXU) ---------------------
    bz = jnp.stack([_banded_z(params["wz"][l], W)
                    for l in range(NL)]).astype(jnp.bfloat16)       # (NL, 3, 128, 128)

    # ---- final-conv sum folded into a per-pixel coefficient tensor ----------
    coef = jnp.tile(_final_coef(params["w_final"], H, W), (BT, 1))  # (M, 128)

    kern = functools.partial(_fused_forward_kernel, H=H, W=W, NF=NF, NL=NL,
                             BT=BT, slope=LRELU_SLOPE)
    out = pl.pallas_call(
        kern,
        out_shape=jax.ShapeDtypeStruct((G, 8, 128), jnp.float32),
        grid=(G,),
        in_specs=[
            pl.BlockSpec((M, KPAD), lambda g: (g, 0)),              # x im2col slab
            pl.BlockSpec((KPAD, NOUT), lambda g: (0, 0)),           # fused x-side weight
            pl.BlockSpec((NL, K, LN, LN), lambda g: (0, 0, 0, 0)),  # banded z weights
            pl.BlockSpec((M, LN), lambda g: (0, 0)),                # final-conv coef
        ],
        out_specs=pl.BlockSpec((1, 8, 128), lambda g: (g, 0, 0)),
        compiler_params=pltpu.CompilerParams(
            dimension_semantics=("parallel",)),
    )(xcol, wbig, bz, coef)

    s_icnn = jnp.sum(out[:, 0, 0])
    s_sfb = jnp.sum(out[:, 0, 1])
    s_l2 = jnp.sum(out[:, 0, 2])

    rho = jax.nn.softplus(params["l2_penalty"])                     # scalar glue
    icnn_mean = s_icnn / float(B * H * W * 1)
    sfb_mean = s_sfb / float(B)
    l2_mean = rho * s_l2 / float(B)
    return icnn_mean + sfb_mean + l2_mean


# ----------------------------------------------------------------------------
# Parameters (deterministic, in-script)
# ----------------------------------------------------------------------------
def init_params(key):
    keys = list(jax.random.split(key, 10))
    it = iter(keys)

    def nrm(k, shape, scale):
        return scale * jax.random.normal(k, shape, jnp.float32)

    wx = [nrm(next(it), (K, K, CIN, NF), 0.3) for _ in range(NL + 1)]
    bx = [nrm(next(it), (NF,), 0.05) for _ in range(NL + 1)]
    wz = [jnp.abs(nrm(next(it), (K, K, NF, NF), 0.1)) for _ in range(NL)]   # ICNN: non-neg
    w_final = jnp.abs(nrm(next(it), (K, K, NF, 1), 0.1))                    # ICNN: non-neg
    w_sfb = nrm(next(it), (K, K, CIN, SFB_F), 0.3)
    l2_penalty = jnp.float32(0.0)                                           # rho = softplus(0)
    return dict(wx=wx, bx=bx, wz=wz, w_final=w_final, w_sfb=w_sfb,
                l2_penalty=l2_penalty)


# ----------------------------------------------------------------------------
# Pure-JAX reference (for correctness check)
# ----------------------------------------------------------------------------
def _conv_ref(x, w, b=None):
    out = lax.conv_general_dilated(
        x, w, window_strides=(1, 1), padding="SAME",
        dimension_numbers=("NHWC", "HWIO", "NHWC"),
        precision=lax.Precision.HIGHEST)
    if b is not None:
        out = out + b
    return out


def wrapper_reference(params, x_nchw):
    x = jnp.transpose(x_nchw, (0, 2, 3, 1)).astype(jnp.float32)
    B = x.shape[0]
    lrelu = lambda v: jnp.where(v > 0, v, LRELU_SLOPE * v)

    z = lrelu(_conv_ref(x, params["wx"][0], params["bx"][0]))
    for l in range(NL):
        z = lrelu(_conv_ref(z, params["wz"][l])
                  + _conv_ref(x, params["wx"][l + 1], params["bx"][l + 1]))
    zf = _conv_ref(z, params["w_final"])
    icnn_out = zf.reshape(B, -1).mean(axis=1)

    sfb_out = jnp.abs(_conv_ref(x, params["w_sfb"])).reshape(B, -1).sum(axis=1)

    rho = jax.nn.softplus(params["l2_penalty"])
    l2_out = rho * (x.reshape(B, -1) ** 2).sum(axis=1)

    return icnn_out.mean() + sfb_out.mean() + l2_out.mean()


# ----------------------------------------------------------------------------
if __name__ == "__main__":
    key = jax.random.PRNGKey(0)
    k_x, k_p = jax.random.split(key)

    B, C, H, W = 2, 1, 16, 16
    x = jax.random.normal(k_x, (B, C, H, W), jnp.float32)           # NCHW, as PyTorch
    params = init_params(k_p)

    fwd = jax.jit(wrapper_forward)
    y = fwd(params, x)
    y = jax.block_until_ready(y)

    y_ref = wrapper_reference(params, x)
    np.testing.assert_allclose(np.asarray(y), np.asarray(y_ref),
                               rtol=1e-2, atol=1e-2)

    print("KERNEL_OK")
</pallas_src>

<mosaic_0001>
module attributes {stable_mosaic.version = 11 : i64} {
  func.func @_fused_forward_kernel(%arg0: i32, %arg1: memref<16x256xf32, #tpu.memory_space<vmem>>, %arg2: memref<256x512xf32, #tpu.memory_space<vmem>>, %arg3: memref<2x3x128x128xbf16, #tpu.memory_space<vmem>>, %arg4: memref<16x128xf32, #tpu.memory_space<vmem>>, %arg5: memref<1x8x128xf32, #tpu.memory_space<vmem>>) attributes {dimension_semantics = [#tpu.dimension_semantics<parallel>], iteration_bounds = array<i64: 2>, scalar_prefetch = 0 : i64, scratch_operands = 0 : i64, tpu.core_type = #tpu.core_type<tc>, window_params = [{transform_indices = @transform_0, window_bounds = array<i64: 16, 256>}, {pipeline_mode = #tpu.pipeline_mode<synchronous>, transform_indices = @transform_1, window_bounds = array<i64: 256, 512>}, {pipeline_mode = #tpu.pipeline_mode<synchronous>, transform_indices = @transform_2, window_bounds = array<i64: 2, 3, 128, 128>}, {pipeline_mode = #tpu.pipeline_mode<synchronous>, transform_indices = @transform_3, window_bounds = array<i64: 16, 128>}, {transform_indices = @transform_4, window_bounds = array<i64: 1, 8, 128>}]} {
    %c0 = arith.constant 0 : index
    %c0_0 = arith.constant 0 : index
    %0 = vector.load %arg1[%c0, %c0_0] : memref<16x256xf32, #tpu.memory_space<vmem>>, vector<16x256xf32>
    %c0_1 = arith.constant 0 : index
    %c0_2 = arith.constant 0 : index
    %1 = vector.load %arg2[%c0_1, %c0_2] : memref<256x512xf32, #tpu.memory_space<vmem>>, vector<256x512xf32>
    %cst = arith.constant dense<0.000000e+00> : vector<16x512xf32>
    %2 = tpu.matmul %0, %1, %cst {dimension_numbers = #tpu.dot_dimension_numbers<[1], [0], [0], [1], [0, 0, 1, 1], [], []>} : vector<16x256xf32>, vector<256x512xf32>, vector<16x512xf32> -> vector<16x512xf32>
    %3 = tpu.iota {dimensions = array<i32: 0>} : vector<16x128xi32>
    %c16_i32 = arith.constant 16 : i32
    %c0_i32 = arith.constant 0 : i32
    %4 = arith.cmpi eq, %c16_i32, %c0_i32 : i32
    %c1_i32 = arith.constant 1 : i32
    %5 = arith.select %4, %c1_i32, %c16_i32 : i32
    %6 = vector.broadcast %5 : i32 to vector<16x128xi32>
    %7 = arith.remsi %3, %6 : vector<16x128xi32>
    %c0_i32_3 = arith.constant 0 : i32
    %8 = vector.broadcast %c0_i32_3 : i32 to vector<16x128xi32>
    %9 = arith.cmpi ne, %7, %8 : vector<16x128xi32>
    %c0_i32_4 = arith.constant 0 : i32
    %10 = vector.broadcast %c0_i32_4 : i32 to vector<16x128xi32>
    %11 = arith.cmpi slt, %7, %10 : vector<16x128xi32>
    %c0_i32_5 = arith.constant 0 : i32
    %12 = arith.cmpi slt, %5, %c0_i32_5 : i32
    %13 = vector.broadcast %12 : i1 to vector<16x128xi1>
    %14 = vector.broadcast %13 : vector<16x128xi1> to vector<16x128xi1>
    %15 = arith.xori %11, %14 : vector<16x128xi1>
    %16 = arith.andi %15, %9 : vector<16x128xi1>
    %17 = vector.broadcast %5 : i32 to vector<16x128xi32>
    %18 = arith.addi %7, %17 : vector<16x128xi32>
    %19 = arith.select %16, %18, %7 : vector<16x128xi1>, vector<16x128xi32>
    %c0_i32_6 = arith.constant 0 : i32
    %20 = vector.broadcast %c0_i32_6 : i32 to vector<16x128xi32>
    %21 = arith.cmpi ne, %19, %20 : vector<16x128xi32>
    %c16_i32_7 = arith.constant 16 : i32
    %c0_i32_8 = arith.constant 0 : i32
    %22 = arith.cmpi eq, %c16_i32_7, %c0_i32_8 : i32
    %c1_i32_9 = arith.constant 1 : i32
    %23 = arith.select %22, %c1_i32_9, %c16_i32_7 : i32
    %24 = vector.broadcast %23 : i32 to vector<16x128xi32>
    %25 = arith.remsi %3, %24 : vector<16x128xi32>
    %c0_i32_10 = arith.constant 0 : i32
    %26 = vector.broadcast %c0_i32_10 : i32 to vector<16x128xi32>
    %27 = arith.cmpi ne, %25, %26 : vector<16x128xi32>
    %c0_i32_11 = arith.constant 0 : i32
    %28 = vector.broadcast %c0_i32_11 : i32 to vector<16x128xi32>
    %29 = arith.cmpi slt, %25, %28 : vector<16x128xi32>
    %c0_i32_12 = arith.constant 0 : i32
    %30 = arith.cmpi slt, %23, %c0_i32_12 : i32
    %31 = vector.broadcast %30 : i1 to vector<16x128xi1>
    %32 = vector.broadcast %31 : vector<16x128xi1> to vector<16x128xi1>
    %33 = arith.xori %29, %32 : vector<16x128xi1>
    %34 = arith.andi %33, %27 : vector<16x128xi1>
    %35 = vector.broadcast %23 : i32 to vector<16x128xi32>
    %36 = arith.addi %25, %35 : vector<16x128xi32>
    %37 = arith.select %34, %36, %25 : vector<16x128xi1>, vector<16x128xi32>
    %c15_i32 = arith.constant 15 : i32
    %38 = vector.broadcast %c15_i32 : i32 to vector<16x128xi32>
    %39 = arith.cmpi ne, %37, %38 : vector<16x128xi32>
    %40 = vector.extract_strided_slice %2 {offsets = [0, 0], sizes = [16, 128], strides = [1, 1]} : vector<16x512xf32> to vector<16x128xf32>
    %cst_13 = arith.constant 0.000000e+00 : f32
    %41 = vector.broadcast %cst_13 : f32 to vector<16x128xf32>
    %42 = arith.cmpf ogt, %40, %41 : vector<16x128xf32>
    %cst_14 = arith.constant 2.000000e-01 : f32
    %43 = vector.broadcast %cst_14 : f32 to vector<16x128xf32>
    %44 = arith.mulf %43, %40 : vector<16x128xf32>
    %45 = arith.select %42, %40, %44 : vector<16x128xi1>, vector<16x128xf32>
    %c1_i32_15 = arith.constant 1 : i32
    %46 = tpu.dynamic_rotate %45 by %c1_i32_15 dim 0 : vector<16x128xf32>, i32 -> vector<16x128xf32>
    %cst_16 = arith.constant 0.000000e+00 : f32
    %47 = vector.broadcast %cst_16 : f32 to vector<16x128xf32>
    %48 = arith.select %21, %46, %47 : vector<16x128xi1>, vector<16x128xf32>
    %c15_i32_17 = arith.constant 15 : i32
    %49 = tpu.dynamic_rotate %45 by %c15_i32_17 dim 0 : vector<16x128xf32>, i32 -> vector<16x128xf32>
    %cst_18 = arith.constant 0.000000e+00 : f32
    %50 = vector.broadcast %cst_18 : f32 to vector<16x128xf32>
    %51 = arith.select %39, %49, %50 : vector<16x128xi1>, vector<16x128xf32>
    %52 = arith.truncf %48 : vector<16x128xf32> to vector<16x128xbf16>
    %c0_19 = arith.constant 0 : index
    %c0_20 = arith.constant 0 : index
    %c0_21 = arith.constant 0 : index
    %c0_22 = arith.constant 0 : index
    %53 = vector.load %arg3[%c0_19, %c0_20, %c0_21, %c0_22] : memref<2x3x128x128xbf16, #tpu.memory_space<vmem>>, vector<1x1x128x128xbf16>
    %54 = vector.shape_cast %53 : vector<1x1x128x128xbf16> to vector<128x128xbf16>
    %cst_23 = arith.constant dense<0.000000e+00> : vector<16x128xf32>
    %55 = tpu.matmul %52, %54, %cst_23 {dimension_numbers = #tpu.dot_dimension_numbers<[1], [0], [0], [1], [0, 0, 1, 1], [], []>} : vector<16x128xbf16>, vector<128x128xbf16>, vector<16x128xf32> -> vector<16x128xf32>
    %56 = arith.truncf %45 : vector<16x128xf32> to vector<16x128xbf16>
    %c0_24 = arith.constant 0 : index
    %c1 = arith.constant 1 : index
    %c0_25 = arith.constant 0 : index
    %c0_26 = arith.constant 0 : index
    %57 = vector.load %arg3[%c0_24, %c1, %c0_25, %c0_26] : memref<2x3x128x128xbf16, #tpu.memory_space<vmem>>, vector<1x1x128x128xbf16>
    %58 = vector.shape_cast %57 : vector<1x1x128x128xbf16> to vector<128x128xbf16>
    %cst_27 = arith.constant dense<0.000000e+00> : vector<16x128xf32>
    %59 = tpu.matmul %56, %58, %cst_27 {dimension_numbers = #tpu.dot_dimension_numbers<[1], [0], [0], [1], [0, 0, 1, 1], [], []>} : vector<16x128xbf16>, vector<128x128xbf16>, vector<16x128xf32> -> vector<16x128xf32>
    %60 = arith.addf %55, %59 : vector<16x128xf32>
    %61 = arith.truncf %51 : vector<16x128xf32> to vector<16x128xbf16>
    %c0_28 = arith.constant 0 : index
    %c2 = arith.constant 2 : index
    %c0_29 = arith.constant 0 : index
    %c0_30 = arith.constant 0 : index
    %62 = vector.load %arg3[%c0_28, %c2, %c0_29, %c0_30] : memref<2x3x128x128xbf16, #tpu.memory_space<vmem>>, vector<1x1x128x128xbf16>
    %63 = vector.shape_cast %62 : vector<1x1x128x128xbf16> to vector<128x128xbf16>
    %cst_31 = arith.constant dense<0.000000e+00> : vector<16x128xf32>
    %64 = tpu.matmul %61, %63, %cst_31 {dimension_numbers = #tpu.dot_dimension_numbers<[1], [0], [0], [1], [0, 0, 1, 1], [], []>} : vector<16x128xbf16>, vector<128x128xbf16>, vector<16x128xf32> -> vector<16x128xf32>
    %65 = arith.addf %60, %64 : vector<16x128xf32>
    %66 = vector.extract_strided_slice %2 {offsets = [0, 128], sizes = [16, 128], strides = [1, 1]} : vector<16x512xf32> to vector<16x128xf32>
    %67 = arith.addf %65, %66 : vector<16x128xf32>
    %cst_32 = arith.constant 0.000000e+00 : f32
    %68 = vector.broadcast %cst_32 : f32 to vector<16x128xf32>
    %69 = arith.cmpf ogt, %67, %68 : vector<16x128xf32>
    %cst_33 = arith.constant 2.000000e-01 : f32
    %70 = vector.broadcast %cst_33 : f32 to vector<16x128xf32>
    %71 = arith.mulf %70, %67 : vector<16x128xf32>
    %72 = arith.select %69, %67, %71 : vector<16x128xi1>, vector<16x128xf32>
    %c1_i32_34 = arith.constant 1 : i32
    %73 = tpu.dynamic_rotate %72 by %c1_i32_34 dim 0 : vector<16x128xf32>, i32 -> vector<16x128xf32>
    %cst_35 = arith.constant 0.000000e+00 : f32
    %74 = vector.broadcast %cst_35 : f32 to vector<16x128xf32>
    %75 = arith.select %21, %73, %74 : vector<16x128xi1>, vector<16x128xf32>
    %c15_i32_36 = arith.constant 15 : i32
    %76 = tpu.dynamic_rotate %72 by %c15_i32_36 dim 0 : vector<16x128xf32>, i32 -> vector<16x128xf32>
    %cst_37 = arith.constant 0.000000e+00 : f32
    %77 = vector.broadcast %cst_37 : f32 to vector<16x128xf32>
    %78 = arith.select %39, %76, %77 : vector<16x128xi1>, vector<16x128xf32>
    %79 = arith.truncf %75 : vector<16x128xf32> to vector<16x128xbf16>
    %c1_38 = arith.constant 1 : index
    %c0_39 = arith.constant 0 : index
    %c0_40 = arith.constant 0 : index
    %c0_41 = arith.constant 0 : index
    %80 = vector.load %arg3[%c1_38, %c0_39, %c0_40, %c0_41] : memref<2x3x128x128xbf16, #tpu.memory_space<vmem>>, vector<1x1x128x128xbf16>
    %81 = vector.shape_cast %80 : vector<1x1x128x128xbf16> to vector<128x128xbf16>
    %cst_42 = arith.constant dense<0.000000e+00> : vector<16x128xf32>
    %82 = tpu.matmul %79, %81, %cst_42 {dimension_numbers = #tpu.dot_dimension_numbers<[1], [0], [0], [1], [0, 0, 1, 1], [], []>} : vector<16x128xbf16>, vector<128x128xbf16>, vector<16x128xf32> -> vector<16x128xf32>
    %83 = arith.truncf %72 : vector<16x128xf32> to vector<16x128xbf16>
    %c1_43 = arith.constant 1 : index
    %c1_44 = arith.constant 1 : index
    %c0_45 = arith.constant 0 : index
    %c0_46 = arith.constant 0 : index
    %84 = vector.load %arg3[%c1_43, %c1_44, %c0_45, %c0_46] : memref<2x3x128x128xbf16, #tpu.memory_space<vmem>>, vector<1x1x128x128xbf16>
    %85 = vector.shape_cast %84 : vector<1x1x128x128xbf16> to vector<128x128xbf16>
    %cst_47 = arith.constant dense<0.000000e+00> : vector<16x128xf32>
    %86 = tpu.matmul %83, %85, %cst_47 {dimension_numbers = #tpu.dot_dimension_numbers<[1], [0], [0], [1], [0, 0, 1, 1], [], []>} : vector<16x128xbf16>, vector<128x128xbf16>, vector<16x128xf32> -> vector<16x128xf32>
    %87 = arith.addf %82, %86 : vector<16x128xf32>
    %88 = arith.truncf %78 : vector<16x128xf32> to vector<16x128xbf16>
    %c1_48 = arith.constant 1 : index
    %c2_49 = arith.constant 2 : index
    %c0_50 = arith.constant 0 : index
    %c0_51 = arith.constant 0 : index
    %89 = vector.load %arg3[%c1_48, %c2_49, %c0_50, %c0_51] : memref<2x3x128x128xbf16, #tpu.memory_space<vmem>>, vector<1x1x128x128xbf16>
    %90 = vector.shape_cast %89 : vector<1x1x128x128xbf16> to vector<128x128xbf16>
    %cst_52 = arith.constant dense<0.000000e+00> : vector<16x128xf32>
    %91 = tpu.matmul %88, %90, %cst_52 {dimension_numbers = #tpu.dot_dimension_numbers<[1], [0], [0], [1], [0, 0, 1, 1], [], []>} : vector<16x128xbf16>, vector<128x128xbf16>, vector<16x128xf32> -> vector<16x128xf32>
    %92 = arith.addf %87, %91 : vector<16x128xf32>
    %93 = vector.extract_strided_slice %2 {offsets = [0, 256], sizes = [16, 128], strides = [1, 1]} : vector<16x512xf32> to vector<16x128xf32>
    %94 = arith.addf %92, %93 : vector<16x128xf32>
    %cst_53 = arith.constant 0.000000e+00 : f32
    %95 = vector.broadcast %cst_53 : f32 to vector<16x128xf32>
    %96 = arith.cmpf ogt, %94, %95 : vector<16x128xf32>
    %cst_54 = arith.constant 2.000000e-01 : f32
    %97 = vector.broadcast %cst_54 : f32 to vector<16x128xf32>
    %98 = arith.mulf %97, %94 : vector<16x128xf32>
    %99 = arith.select %96, %94, %98 : vector<16x128xi1>, vector<16x128xf32>
    %c0_55 = arith.constant 0 : index
    %c0_56 = arith.constant 0 : index
    %100 = vector.load %arg4[%c0_55, %c0_56] : memref<16x128xf32, #tpu.memory_space<vmem>>, vector<16x128xf32>
    %101 = arith.mulf %99, %100 : vector<16x128xf32>
    %102 = vector.shape_cast %101 : vector<16x128xf32> to vector<1x16x128xf32>
    %cst_57 = arith.constant dense<0.000000e+00> : vector<1xf32>
    %103 = vector.multi_reduction <add>, %102, %cst_57 [1, 2] : vector<1x16x128xf32> to vector<1xf32>
    %104 = vector.shape_cast %103 : vector<1xf32> to vector<1x1x1xf32>
    %105 = vector.extract %104[0, 0, 0] : f32 from vector<1x1x1xf32>
    %106 = vector.extract_strided_slice %2 {offsets = [0, 384], sizes = [16, 128], strides = [1, 1]} : vector<16x512xf32> to vector<16x128xf32>
    %107 = math.absf %106 : vector<16x128xf32>
    %108 = vector.shape_cast %107 : vector<16x128xf32> to vector<1x16x128xf32>
    %cst_58 = arith.constant dense<0.000000e+00> : vector<1xf32>
    %109 = vector.multi_reduction <add>, %108, %cst_58 [1, 2] : vector<1x16x128xf32> to vector<1xf32>
    %110 = vector.shape_cast %109 : vector<1xf32> to vector<1x1x1xf32>
    %111 = vector.extract %110[0, 0, 0] : f32 from vector<1x1x1xf32>
    %112 = vector.extract_strided_slice %0 {offsets = [0, 64], sizes = [16, 16], strides = [1, 1]} : vector<16x256xf32> to vector<16x16xf32>
    %113 = arith.mulf %112, %112 : vector<16x16xf32>
    %114 = vector.shape_cast %113 : vector<16x16xf32> to vector<1x16x16xf32>
    %cst_59 = arith.constant dense<0.000000e+00> : vector<1xf32>
    %115 = vector.multi_reduction <add>, %114, %cst_59 [1, 2] : vector<1x16x16xf32> to vector<1xf32>
    %116 = vector.shape_cast %115 : vector<1xf32> to vector<1x1x1xf32>
    %117 = vector.extract %116[0, 0, 0] : f32 from vector<1x1x1xf32>
    %118 = tpu.iota {dimensions = array<i32: 1>} : vector<8x128xi32>
    %119 = tpu.iota {dimensions = array<i32: 0>} : vector<8x128xi32>
    %c0_i32_60 = arith.constant 0 : i32
    %120 = vector.broadcast %c0_i32_60 : i32 to vector<8x128xi32>
    %121 = arith.cmpi eq, %118, %120 : vector<8x128xi32>
    %c1_i32_61 = arith.constant 1 : i32
    %122 = vector.broadcast %c1_i32_61 : i32 to vector<8x128xi32>
    %123 = arith.cmpi eq, %118, %122 : vector<8x128xi32>
    %c2_i32 = arith.constant 2 : i32
    %124 = vector.broadcast %c2_i32 : i32 to vector<8x128xi32>
    %125 = arith.cmpi eq, %118, %124 : vector<8x128xi32>
    %cst_62 = arith.constant 0.000000e+00 : f32
    %126 = vector.broadcast %117 : f32 to vector<8x128xf32>
    %127 = vector.broadcast %cst_62 : f32 to vector<8x128xf32>
    %128 = arith.select %125, %126, %127 : vector<8x128xi1>, vector<8x128xf32>
    %129 = vector.broadcast %111 : f32 to vector<8x128xf32>
    %130 = arith.select %123, %129, %128 : vector<8x128xi1>, vector<8x128xf32>
    %131 = vector.broadcast %105 : f32 to vector<8x128xf32>
    %132 = arith.select %121, %131, %130 : vector<8x128xi1>, vector<8x128xf32>
    %c0_i32_63 = arith.constant 0 : i32
    %133 = vector.broadcast %c0_i32_63 : i32 to vector<8x128xi32>
    %134 = arith.cmpi eq, %119, %133 : vector<8x128xi32>
    %cst_64 = arith.constant 0.000000e+00 : f32
    %135 = vector.broadcast %cst_64 : f32 to vector<8x128xf32>
    %136 = arith.select %134, %132, %135 : vector<8x128xi1>, vector<8x128xf32>
    %c0_65 = arith.constant 0 : index
    %c0_66 = arith.constant 0 : index
    %c0_67 = arith.constant 0 : index
    %137 = vector.load %arg5[%c0_65, %c0_66, %c0_67] : memref<1x8x128xf32, #tpu.memory_space<vmem>>, vector<1x8x128xf32>
    %138 = vector.shape_cast %137 : vector<1x8x128xf32> to vector<8x128xf32>
    %139 = vector.shape_cast %136 : vector<8x128xf32> to vector<1x8x128xf32>
    tpu.vector_store %arg5[%c0_65, %c0_66, %c0_67], %139 {strides = array<i32>} : memref<1x8x128xf32, #tpu.memory_space<vmem>>, vector<1x8x128xf32>,
    return
  }
  func.func @transform_0(%arg0: i32) -> (i32, i32) {
    %c0_i32 = arith.constant 0 : i32
    %c0_i32_0 = arith.constant 0 : i32
    return %arg0, %c0_i32 : i32, i32
  }
  func.func @transform_1(%arg0: i32) -> (i32, i32) {
    %c0_i32 = arith.constant 0 : i32
    %c0_i32_0 = arith.constant 0 : i32
    %c0_i32_1 = arith.constant 0 : i32
    return %c0_i32, %c0_i32_0 : i32, i32
  }
  func.func @transform_2(%arg0: i32) -> (i32, i32, i32, i32) {
    %c0_i32 = arith.constant 0 : i32
    %c0_i32_0 = arith.constant 0 : i32
    %c0_i32_1 = arith.constant 0 : i32
    %c0_i32_2 = arith.constant 0 : i32
    %c0_i32_3 = arith.constant 0 : i32
    return %c0_i32, %c0_i32_0, %c0_i32_1, %c0_i32_2 : i32, i32, i32, i32
  }
  func.func @transform_3(%arg0: i32) -> (i32, i32) {
    %c0_i32 = arith.constant 0 : i32
    %c0_i32_0 = arith.constant 0 : i32
    %c0_i32_1 = arith.constant 0 : i32
    return %c0_i32, %c0_i32_0 : i32, i32
  }
  func.func @transform_4(%arg0: i32) -> (i32, i32, i32) {
    %c0_i32 = arith.constant 0 : i32
    %c0_i32_0 = arith.constant 0 : i32
    %c0_i32_1 = arith.constant 0 : i32
    return %arg0, %c0_i32, %c0_i32_0 : i32, i32, i32
  }
}

</mosaic_0001>

<llo_original>
// kernel: tile.18
$region0: #{tile.18}
  #allocation2 [shape = 's32[1]{0}', space=sflag, size = 0x4, scoped, tag = 'scoped memory for tile.18']
  %s0 = inlined_call_operand.hbm [shape: f32[8], index: 0, kind: input, shape index: {}]
  %s1 = inlined_call_operand.vmem [shape: f32[16,8], index: 1, kind: output, shape index: {}]
  $region1: #{tile.18} parent=0
    #allocation0 [shape = 'u8[512]{0}', space=vmem, size = 0x400, scoped, tag = 'operand span for operand 0']
    #allocation1 [shape = 's32[1]{0}', space=sflag, size = 0x4, scoped, tag = 'scoped memory for tile.18']
    %2 = vsyncpa [#allocation1], 0
    // Predicated region
    $region2: #{tile.18} parent=1 // pred_check
      _
    $region3: #{tile.18} parent=1 // pred_check_branch
      %4 = sbr.rel (0) target = $region5
    $region4: #{tile.18} parent=1 // pred_region
      %s6 = ssub.s32 16, 16
      %7 = vsyncadd [#allocation1], %s6
      %s9 = sshll.u32 [#allocation0], 4
      %s10 = int_to_ptr.vmem [resolvable:$true] %s9
      %12 = dma.hbm_to_vmem [thread:$0]  %s0, 16, %s10, [#allocation1]
    $region5: #{tile.18} parent=1 // pred_fallthru
      _
    // Predicated region
    $region6: #{tile.18} parent=1 // pred_check
      _
    $region7: #{tile.18} parent=1 // pred_check_branch
      %14 = sbr.rel (0) target = $region9
    $region8: #{tile.18} parent=1 // pred_region
      %15 = dma.done [#allocation1], 16
    $region9: #{tile.18} parent=1 // pred_fallthru
      _
    %v16 = vld [vmem:[#allocation0] ss:$0 sm:$0xff]
    %17 = vst [vmem:[%s1] sm:$0xff] %v16
    %s18 = scalar_lea.vmem %s1, 8
    %19 = vst [vmem:[%s18] sm:$0xff] %v16
    %20 = vsyncpa [#allocation1], 1

// kernel: tile.19
$region0: #{tile.19}
  %s0 = inlined_call_operand.vmem [shape: f32[16,8], index: 0, kind: input, shape index: {}]
  %s1 = inlined_call_operand.vmem [shape: f32[128], index: 1, kind: output, shape index: {}]
  $region1: #{tile.19} parent=0
    #allocation0 [shape = 'u8[4096]{0}', space=vmem, size = 0x1000, scoped, tag = 'scoped mem for output reshape']
    %v2 = vld [vmem:[%s0] sm:$0x1]
    %vm3 = vcmask 64512
    %4 = vst.msk [vmem:[#allocation0] sm:$0x1] %vm3, %v2
    %s5 = scalar_lea.vmem %s0, 15
    %v6 = vld [vmem:[%s5] sm:$0x1]
    %7 = vrot.lane.b32.xlu0 %v6, 120
    %v8 = vpop.permute.xlu0 %7
    %vm9 = vcmask 1048512
    %10 = vst.msk [vmem:[#allocation0] sm:$0x1] %vm9, %v8
    %s11 = scalar_lea.vmem %s0, 14
    %v12 = vld [vmem:[%s11] sm:$0x1]
    %13 = vrot.lane.b32.xlu0 %v12, 112
    %v14 = vpop.permute.xlu0 %13
    %vm15 = vcmask 982912
    %16 = vst.msk [vmem:[#allocation0] sm:$0x1] %vm15, %v14
    %s17 = scalar_lea.vmem %s0, 13
    %v18 = vld [vmem:[%s17] sm:$0x1]
    %19 = vrot.lane.b32.xlu0 %v18, 104
    %v20 = vpop.permute.xlu0 %19
    %vm21 = vcmask 917312
    %22 = vst.msk [vmem:[#allocation0] sm:$0x1] %vm21, %v20
    %s23 = scalar_lea.vmem %s0, 12
    %v24 = vld [vmem:[%s23] sm:$0x1]
    %25 = vrot.lane.b32.xlu0 %v24, 96
    %v26 = vpop.permute.xlu0 %25
    %vm27 = vcmask 851712
    %28 = vst.msk [vmem:[#allocation0] sm:$0x1] %vm27, %v26
    %s29 = scalar_lea.vmem %s0, 11
    %v30 = vld [vmem:[%s29] sm:$0x1]
    %31 = vrot.lane.b32.xlu0 %v30, 88
    %v32 = vpop.permute.xlu0 %31
    %vm33 = vcmask 786112
    %34 = vst.msk [vmem:[#allocation0] sm:$0x1] %vm33, %v32
    %s35 = scalar_lea.vmem %s0, 10
    %v36 = vld [vmem:[%s35] sm:$0x1]
    %37 = vrot.lane.b32.xlu0 %v36, 80
    %v38 = vpop.permute.xlu0 %37
    %vm39 = vcmask 720512
    %40 = vst.msk [vmem:[#allocation0] sm:$0x1] %vm39, %v38
    %s41 = scalar_lea.vmem %s0, 9
    %v42 = vld [vmem:[%s41] sm:$0x1]
    %43 = vrot.lane.b32.xlu0 %v42, 72
    %v44 = vpop.permute.xlu0 %43
    %vm45 = vcmask 654912
    %46 = vst.msk [vmem:[#allocation0] sm:$0x1] %vm45, %v44
    %s47 = scalar_lea.vmem %s0, 8
    %v48 = vld [vmem:[%s47] sm:$0x1]
    %49 = vrot.lane.b32.xlu0 %v48, 64
    %v50 = vpop.permute.xlu0 %49
    %vm51 = vcmask 589312
    %52 = vst.msk [vmem:[#allocation0] sm:$0x1] %vm51, %v50
    %s53 = scalar_lea.vmem %s0, 7
    %v54 = vld [vmem:[%s53] sm:$0x1]
    %55 = vrot.lane.b32.xlu0 %v54, 56
    %v56 = vpop.permute.xlu0 %55
    %vm57 = vcmask 523712
    %58 = vst.msk [vmem:[#allocation0] sm:$0x1] %vm57, %v56
    %s59 = scalar_lea.vmem %s0, 6
    %v60 = vld [vmem:[%s59] sm:$0x1]
    %61 = vrot.lane.b32.xlu0 %v60, 48
    %v62 = vpop.permute.xlu0 %61
    %vm63 = vcmask 458112
    %64 = vst.msk [vmem:[#allocation0] sm:$0x1] %vm63, %v62
    %s65 = scalar_lea.vmem %s0, 5
    %v66 = vld [vmem:[%s65] sm:$0x1]
    %67 = vrot.lane.b32.xlu0 %v66, 40
    %v68 = vpop.permute.xlu0 %67
    %vm69 = vcmask 392512
    %70 = vst.msk [vmem:[#allocation0] sm:$0x1] %vm69, %v68
    %s71 = scalar_lea.vmem %s0, 4
    %v72 = vld [vmem:[%s71] sm:$0x1]
    %73 = vrot.lane.b32.xlu0 %v72, 32
    %v74 = vpop.permute.xlu0 %73
    %vm75 = vcmask 326912
    %76 = vst.msk [vmem:[#allocation0] sm:$0x1] %vm75, %v74
    %s77 = scalar_lea.vmem %s0, 3
    %v78 = vld [vmem:[%s77] sm:$0x1]
    %79 = vrot.lane.b32.xlu0 %v78, 24
    %v80 = vpop.permute.xlu0 %79
    %vm81 = vcmask 261312
    %82 = vst.msk [vmem:[#allocation0] sm:$0x1] %vm81, %v80
    %s83 = scalar_lea.vmem %s0, 2
    %v84 = vld [vmem:[%s83] sm:$0x1]
    %85 = vrot.lane.b32.xlu0 %v84, 16
    %v86 = vpop.permute.xlu0 %85
    %vm87 = vcmask 195712
    %88 = vst.msk [vmem:[#allocation0] sm:$0x1] %vm87, %v86
    %s89 = scalar_lea.vmem %s0, 1
    %v90 = vld [vmem:[%s89] sm:$0x1]
    %91 = vrot.lane.b32.xlu0 %v90, 8
    %v92 = vpop.permute.xlu0 %91
    %vm93 = vcmask 130112
    %94 = vst.msk [vmem:[#allocation0] sm:$0x1] %vm93, %v92
    %s96 = sshll.u32 1, 1
    %s97 = ssub.s32 %s96, 1
    %v99 = vld [vmem:[#allocation0] sm:%s97]
    %s100 = sshll.u32 1, 1
    %s101 = ssub.s32 %s100, 1
    %102 = vst [vmem:[%s1] sm:%s101] %v99

// kernel: wrapper_forward.1
$region0: #{wrapper_forward.1}
  #allocation0 [shape = 'u32[]', space=smem, size = 0x4, offset = 0x4, fixed_abs, tag = 'smem constant byte address 0x4 - core index']
  #allocation1 [shape = 'u32[144,128]{1,0:T(1,128)}', space=vmem, size = 0x12000, scoped, tag = 'internal scratch']
  %s0 = inlined_call_operand.vmem [shape: f32[32,256], index: 0, kind: input, shape index: {}]
  %s1 = inlined_call_operand.vmem [shape: f32[256,512], index: 1, kind: input, shape index: {}]
  %s2 = inlined_call_operand.vmem [shape: bf16[2,3,128,128], index: 2, kind: input, shape index: {}]
  %s3 = inlined_call_operand.vmem [shape: f32[16,128], index: 3, kind: input, shape index: {}]
  %s4 = inlined_call_operand.vmem [shape: f32[2,8,128], index: 4, kind: output, shape index: {}]
  %s5 = sld [smem:[#allocation0]]
  $region49: #{wrapper_forward.1} parent=0
    _
  %s7 = ssub.s32 1, %s5
  %s8 = scalar_select 0, %s7, %s5
  loop: start=0, step=1, limit=4
  $region2: #{wrapper_forward.1} parent=0 // loop_pre_header
    _
  $region3: #{wrapper_forward.1} parent=0 // loop_header
    %s10 = sphi 0, %s14
    %p11 = scmp.ge.s32.totalorder %s10, 4
    %s20 = sphi 0, %s22
    %s23 = sphi 0, %s20
    %s24 = sphi 0, %s23
    %s40 = sphi 0, %s24
    %s44 = sphi 0, %s44
    %s46 = sphi 0, %s44
    %s47 = sphi 0, %s46
    %s61 = sphi 0, %s47
    %s65 = sphi 0, %s65
    %s67 = sphi 0, %s65
    %s68 = sphi 0, %s67
    %s82 = sphi 0, %s68
    %s86 = sphi 0, %s86
    %s88 = sphi 0, %s86
    %s89 = sphi 0, %s88
    %s103 = sphi 0, %s89
    %s109 = sphi 0, %s111
    %s112 = sphi 0, %s109
    %s113 = sphi 0, %s112
    %s129 = sphi 0, %s113
  $region4: #{wrapper_forward.1} parent=0 // loop_header_branch
    %13 = sbr.rel (%p11) target = $region8
  $region5: #{wrapper_forward.1} parent=0 // loop_body
    %s15 = ssub.s32 %s10, 1
    %s16 = ssub.s32 %s10, 2
    %s17 = sadd.s32 %s10, 1
    %s18 = ssub.s32 %s10, %s17
    %p19 = scmp.eq.s32.totalorder %s18, 0
    %s21 = sadd.s32 %s20, 1
    %s22 = scalar_select %p19, %s20, %s21
    %p25 = pneg %p19
    %p26 = scmp.eq.s32.totalorder %s10, 1
    %p27 = por %p25, %p26
    %p28 = scmp.ne.s32.totalorder %s20, %s23
    %p29 = scmp.eq.s32.totalorder %s10, 0
    %p30 = por %p28, %p29
    %p31 = scmp.ne.s32.totalorder %s20, %s23
    %p32 = scmp.eq.s32.totalorder %s15, 1
    %p33 = por %p31, %p32
    %p34 = scmp.ne.s32.totalorder %s23, %s24
    %p35 = scmp.eq.s32.totalorder %s15, 0
    %p36 = por %p34, %p35
    %p37 = scmp.ne.s32.totalorder %s23, %s24
    %p38 = scmp.eq.s32.totalorder %s16, 1
    %p39 = por %p37, %p38
    %p41 = scmp.ne.s32.totalorder %s24, %s40
    %p42 = scmp.eq.s32.totalorder %s16, 0
    %p43 = por %p41, %p42
    %s45 = sadd.s32 %s44, 1
    %p48 = scmp.eq.s32.totalorder %s10, 1
    %p49 = scmp.ne.s32.totalorder %s44, %s46
    %p50 = scmp.eq.s32.totalorder %s10, 0
    %p51 = por %p49, %p50
    %p52 = scmp.ne.s32.totalorder %s44, %s46
    %p53 = scmp.eq.s32.totalorder %s15, 1
    %p54 = por %p52, %p53
    %p55 = scmp.ne.s32.totalorder %s46, %s47
    %p56 = scmp.eq.s32.totalorder %s15, 0
    %p57 = por %p55, %p56
    %p58 = scmp.ne.s32.totalorder %s46, %s47
    %p59 = scmp.eq.s32.totalorder %s16, 1
    %p60 = por %p58, %p59
    %p62 = scmp.ne.s32.totalorder %s47, %s61
    %p63 = scmp.eq.s32.totalorder %s16, 0
    %p64 = por %p62, %p63
    %s66 = sadd.s32 %s65, 1
    %p69 = scmp.eq.s32.totalorder %s10, 1
    %p70 = scmp.ne.s32.totalorder %s65, %s67
    %p71 = scmp.eq.s32.totalorder %s10, 0
    %p72 = por %p70, %p71
    %p73 = scmp.ne.s32.totalorder %s65, %s67
    %p74 = scmp.eq.s32.totalorder %s15, 1
    %p75 = por %p73, %p74
    %p76 = scmp.ne.s32.totalorder %s67, %s68
    %p77 = scmp.eq.s32.totalorder %s15, 0
    %p78 = por %p76, %p77
    %p79 = scmp.ne.s32.totalorder %s67, %s68
    %p80 = scmp.eq.s32.totalorder %s16, 1
    %p81 = por %p79, %p80
    %p83 = scmp.ne.s32.totalorder %s68, %s82
    %p84 = scmp.eq.s32.totalorder %s16, 0
    %p85 = por %p83, %p84
    %s87 = sadd.s32 %s86, 1
    %p90 = scmp.eq.s32.totalorder %s10, 1
    %p91 = scmp.ne.s32.totalorder %s86, %s88
    %p92 = scmp.eq.s32.totalorder %s10, 0
    %p93 = por %p91, %p92
    %p94 = scmp.ne.s32.totalorder %s86, %s88
    %p95 = scmp.eq.s32.totalorder %s15, 1
    %p96 = por %p94, %p95
    %p97 = scmp.ne.s32.totalorder %s88, %s89
    %p98 = scmp.eq.s32.totalorder %s15, 0
    %p99 = por %p97, %p98
    %p100 = scmp.ne.s32.totalorder %s88, %s89
    %p101 = scmp.eq.s32.totalorder %s16, 1
    %p102 = por %p100, %p101
    %p104 = scmp.ne.s32.totalorder %s89, %s103
    %p105 = scmp.eq.s32.totalorder %s16, 0
    %p106 = por %p104, %p105
    %s107 = ssub.s32 %s10, %s17
    %p108 = scmp.eq.s32.totalorder %s107, 0
    %s110 = sadd.s32 %s109, 1
    %s111 = scalar_select %p108, %s109, %s110
    %p114 = pneg %p108
    %p115 = scmp.eq.s32.totalorder %s10, 1
    %p116 = por %p114, %p115
    %p117 = scmp.ne.s32.totalorder %s109, %s112
    %p118 = scmp.eq.s32.totalorder %s10, 0
    %p119 = por %p117, %p118
    %p120 = scmp.ne.s32.totalorder %s109, %s112
    %p121 = scmp.eq.s32.totalorder %s15, 1
    %p122 = por %p120, %p121
    %p123 = scmp.ne.s32.totalorder %s112, %s113
    %p124 = scmp.eq.s32.totalorder %s15, 0
    %p125 = por %p123, %p124
    %p126 = scmp.ne.s32.totalorder %s112, %s113
    %p127 = scmp.eq.s32.totalorder %s16, 1
    %p128 = por %p126, %p127
    %p130 = scmp.ne.s32.totalorder %s113, %s129
    %p131 = scmp.eq.s32.totalorder %s16, 0
    %p132 = por %p130, %p131
    %p133 = scmp.le.s32.totalorder 1, %s10
    %p134 = scmp.lt.s32.totalorder %s10, 3
    %p135 = pnand %p133, %p134
    %p136 = pneg %p135
    // Predicated region
    $region9: #{wrapper_forward.1} parent=5 // pred_check
      _
    $region10: #{wrapper_forward.1} parent=5 // pred_check_branch
      %138 = sbr.rel (%p135) target = $region12
    $region11: #{wrapper_forward.1} parent=5 // pred_region
      %s139 = ssub.s32 %s10, 1
      // Predicated region
      $region13: #{wrapper_forward.1} parent=11 // pred_check
        %p140 = pneg %p57
      $region14: #{wrapper_forward.1} parent=11 // pred_check_branch
        %142 = sbr.rel (%p140) target = $region16
      $region15: #{wrapper_forward.1} parent=11 // pred_region
        _
      $region16: #{wrapper_forward.1} parent=11 // pred_fallthru
        _
      // Predicated region
      $region17: #{wrapper_forward.1} parent=11 // pred_check
        %p143 = pneg %p78
      $region18: #{wrapper_forward.1} parent=11 // pred_check_branch
        %145 = sbr.rel (%p143) target = $region20
      $region19: #{wrapper_forward.1} parent=11 // pred_region
        _
      $region20: #{wrapper_forward.1} parent=11 // pred_fallthru
        _
      // Predicated region
      $region21: #{wrapper_forward.1} parent=11 // pred_check
        %p146 = pneg %p99
      $region22: #{wrapper_forward.1} parent=11 // pred_check_branch
        %148 = sbr.rel (%p146) target = $region24
      $region23: #{wrapper_forward.1} parent=11 // pred_region
        _
      $region24: #{wrapper_forward.1} parent=11 // pred_fallthru
        _
    $region12: #{wrapper_forward.1} parent=5 // pred_fallthru
      _
    %p149 = scmp.lt.s32.totalorder %s10, 2
    // Predicated region
    $region25: #{wrapper_forward.1} parent=5 // pred_check
      %p150 = pneg %p149
    $region26: #{wrapper_forward.1} parent=5 // pred_check_branch
      %152 = sbr.rel (%p150) target = $region28
    $region27: #{wrapper_forward.1} parent=5 // pred_region
      // Predicated region
      $region29: #{wrapper_forward.1} parent=27 // pred_check
        %p153 = pneg %p30
      $region30: #{wrapper_forward.1} parent=27 // pred_check_branch
        %155 = sbr.rel (%p153) target = $region32
      $region31: #{wrapper_forward.1} parent=27 // pred_region
        %s156 = smul.u32 2, %s10
        %p157 = scmp.lt.s32.totalorder %s156, 3
        %s158 = scalar_select %p157, %s156, 3
        %s159 = smul.addr %s158, 2
        %s160 = smul.addr %s159, 8
        %s161 = scalar_lea.vmem %s0, %s160
        %s162 = smul.u32 2, %s10
      $region32: #{wrapper_forward.1} parent=27 // pred_fallthru
        _
    $region28: #{wrapper_forward.1} parent=5 // pred_fallthru
      _
    %p163 = scmp.le.s32.totalorder 1, %s10
    %p164 = scmp.lt.s32.totalorder %s10, 3
    %p165 = pnand %p163, %p164
    %p166 = pneg %p165
    // Predicated region
    $region33: #{wrapper_forward.1} parent=5 // pred_check
      _
    $region34: #{wrapper_forward.1} parent=5 // pred_check_branch
      %168 = sbr.rel (%p165) target = $region36
    $region35: #{wrapper_forward.1} parent=5 // pred_region
      %s169 = ssub.s32 %s10, 1
      %s170 = smul.u32 2, %s15
      %p171 = scmp.lt.s32.totalorder %s170, 3
      %s172 = scalar_select %p171, %s170, 3
      %s173 = smul.addr %s172, 2
      %s174 = smul.addr %s173, 8
      %s175 = scalar_lea.vmem %s0, %s174
      %p176 = pneg %p36
      %p177 = pneg %p33
      %p178 = pneg %p57
      %p179 = pneg %p54
      %p180 = pneg %p78
      %p181 = pneg %p75
      %p182 = pneg %p99
      %p183 = pneg %p96
      %p184 = pneg %p125
      %p185 = pneg %p122
      %p186 = scmp.lt.s32.totalorder %s15, 1
      %s187 = scalar_select %p186, %s15, 1
      %s188 = smul.addr %s187, 8
      %s189 = scalar_lea.vmem %s4, %s188
      %s190 = smul.u32 2, %s15
      %p191 = scmp.lt.s32.totalorder %s190, 3
      %s192 = scalar_select %p191, %s190, 3
      %s193 = smul.addr %s192, 2
      %s194 = smul.addr %s193, 8
      %s195 = scalar_lea.vmem %s0, %s194
      %s196 = smul.u32 2, %s15
      %p197 = scmp.lt.s32.totalorder %s15, 1
      %s198 = scalar_select %p197, %s15, 1
      %s199 = smul.addr %s198, 8
      %s200 = scalar_lea.vmem %s4, %s199
      %v202 = vld [vmem:[%s195] sm:$0xff]
      %v203 = vld [vmem:[%s195 + $0x8] sm:$0xff]
      %v204 = vld [vmem:[%s195 + $0x10] sm:$0xff]
      %v205 = vld [vmem:[%s195 + $0x18] sm:$0xff]
      %v206 = vld [vmem:[%s1] sm:$0xff]
      %v207 = vld [vmem:[%s1 + $0x8] sm:$0xff]
      %v208 = vld [vmem:[%s1 + $0x10] sm:$0xff]
      %v209 = vld [vmem:[%s1 + $0x18] sm:$0xff]
      %v210 = vld [vmem:[%s1 + $0x20] sm:$0xff]
      %v211 = vld [vmem:[%s1 + $0x28] sm:$0xff]
      %v212 = vld [vmem:[%s1 + $0x30] sm:$0xff]
      %v213 = vld [vmem:[%s1 + $0x38] sm:$0xff]
      %v214 = vld [vmem:[%s1 + $0x40] sm:$0xff]
      %v215 = vld [vmem:[%s1 + $0x48] sm:$0xff]
      %v216 = vld [vmem:[%s1 + $0x50] sm:$0xff]
      %v217 = vld [vmem:[%s1 + $0x58] sm:$0xff]
      %v218 = vld [vmem:[%s1 + $0x60] sm:$0xff]
      %v219 = vld [vmem:[%s1 + $0x68] sm:$0xff]
      %v220 = vld [vmem:[%s1 + $0x70] sm:$0xff]
      %v221 = vld [vmem:[%s1 + $0x78] sm:$0xff]
      %v222 = vld [vmem:[%s1 + $0x80] sm:$0xff]
      %v223 = vld [vmem:[%s1 + $0x88] sm:$0xff]
      %v224 = vld [vmem:[%s1 + $0x90] sm:$0xff]
      %v225 = vld [vmem:[%s1 + $0x98] sm:$0xff]
      %v226 = vld [vmem:[%s1 + $0xa0] sm:$0xff]
      %v227 = vld [vmem:[%s1 + $0xa8] sm:$0xff]
      %v228 = vld [vmem:[%s1 + $0xb0] sm:$0xff]
      %v229 = vld [vmem:[%s1 + $0xb8] sm:$0xff]
      %v230 = vld [vmem:[%s1 + $0xc0] sm:$0xff]
      %v231 = vld [vmem:[%s1 + $0xc8] sm:$0xff]
      %v232 = vld [vmem:[%s1 + $0xd0] sm:$0xff]
      %v233 = vld [vmem:[%s1 + $0xd8] sm:$0xff]
      %v234 = vld [vmem:[%s1 + $0xe0] sm:$0xff]
      %v235 = vld [vmem:[%s1 + $0xe8] sm:$0xff]
      %v236 = vld [vmem:[%s1 + $0xf0] sm:$0xff]
      %v237 = vld [vmem:[%s1 + $0xf8] sm:$0xff]
      %v238 = vld [vmem:[%s1 + $0x100] sm:$0xff]
      %v239 = vld [vmem:[%s1 + $0x108] sm:$0xff]
      %v240 = vld [vmem:[%s1 + $0x110] sm:$0xff]
      %v241 = vld [vmem:[%s1 + $0x118] sm:$0xff]
      %v242 = vld [vmem:[%s1 + $0x120] sm:$0xff]
      %v243 = vld [vmem:[%s1 + $0x128] sm:$0xff]
      %v244 = vld [vmem:[%s1 + $0x130] sm:$0xff]
      %v245 = vld [vmem:[%s1 + $0x138] sm:$0xff]
      %v246 = vld [vmem:[%s1 + $0x140] sm:$0xff]
      %v247 = vld [vmem:[%s1 + $0x148] sm:$0xff]
      %v248 = vld [vmem:[%s1 + $0x150] sm:$0xff]
      %v249 = vld [vmem:[%s1 + $0x158] sm:$0xff]
      %v250 = vld [vmem:[%s1 + $0x160] sm:$0xff]
      %v251 = vld [vmem:[%s1 + $0x168] sm:$0xff]
      %v252 = vld [vmem:[%s1 + $0x170] sm:$0xff]
      %v253 = vld [vmem:[%s1 + $0x178] sm:$0xff]
      %v254 = vld [vmem:[%s1 + $0x180] sm:$0xff]
      %v255 = vld [vmem:[%s1 + $0x188] sm:$0xff]
      %v256 = vld [vmem:[%s1 + $0x190] sm:$0xff]
      %v257 = vld [vmem:[%s1 + $0x198] sm:$0xff]
      %v258 = vld [vmem:[%s1 + $0x1a0] sm:$0xff]
      %v259 = vld [vmem:[%s1 + $0x1a8] sm:$0xff]
      %v260 = vld [vmem:[%s1 + $0x1b0] sm:$0xff]
      %v261 = vld [vmem:[%s1 + $0x1b8] sm:$0xff]
      %v262 = vld [vmem:[%s1 + $0x1c0] sm:$0xff]
      %v263 = vld [vmem:[%s1 + $0x1c8] sm:$0xff]
      %v264 = vld [vmem:[%s1 + $0x1d0] sm:$0xff]
      %v265 = vld [vmem:[%s1 + $0x1d8] sm:$0xff]
      %v266 = vld [vmem:[%s1 + $0x1e0] sm:$0xff]
      %v267 = vld [vmem:[%s1 + $0x1e8] sm:$0xff]
      %v268 = vld [vmem:[%s1 + $0x1f0] sm:$0xff]
      %v269 = vld [vmem:[%s1 + $0x1f8] sm:$0xff]
      %v270 = vld [vmem:[%s1 + $0x200] sm:$0xff]
      %v271 = vld [vmem:[%s1 + $0x208] sm:$0xff]
      %v272 = vld [vmem:[%s1 + $0x210] sm:$0xff]
      %v273 = vld [vmem:[%s1 + $0x218] sm:$0xff]
      %v274 = vld [vmem:[%s1 + $0x220] sm:$0xff]
      %v275 = vld [vmem:[%s1 + $0x228] sm:$0xff]
      %v276 = vld [vmem:[%s1 + $0x230] sm:$0xff]
      %v277 = vld [vmem:[%s1 + $0x238] sm:$0xff]
      %v278 = vld [vmem:[%s1 + $0x240] sm:$0xff]
      %v279 = vld [vmem:[%s1 + $0x248] sm:$0xff]
      %v280 = vld [vmem:[%s1 + $0x250] sm:$0xff]
      %v281 = vld [vmem:[%s1 + $0x258] sm:$0xff]
      %v282 = vld [vmem:[%s1 + $0x260] sm:$0xff]
      %v283 = vld [vmem:[%s1 + $0x268] sm:$0xff]
      %v284 = vld [vmem:[%s1 + $0x270] sm:$0xff]
      %v285 = vld [vmem:[%s1 + $0x278] sm:$0xff]
      %v286 = vld [vmem:[%s1 + $0x280] sm:$0xff]
      %v287 = vld [vmem:[%s1 + $0x288] sm:$0xff]
      %v288 = vld [vmem:[%s1 + $0x290] sm:$0xff]
      %v289 = vld [vmem:[%s1 + $0x298] sm:$0xff]
      %v290 = vld [vmem:[%s1 + $0x2a0] sm:$0xff]
      %v291 = vld [vmem:[%s1 + $0x2a8] sm:$0xff]
      %v292 = vld [vmem:[%s1 + $0x2b0] sm:$0xff]
      %v293 = vld [vmem:[%s1 + $0x2b8] sm:$0xff]
      %v294 = vld [vmem:[%s1 + $0x2c0] sm:$0xff]
      %v295 = vld [vmem:[%s1 + $0x2c8] sm:$0xff]
      %v296 = vld [vmem:[%s1 + $0x2d0] sm:$0xff]
      %v297 = vld [vmem:[%s1 + $0x2d8] sm:$0xff]
      %v298 = vld [vmem:[%s1 + $0x2e0] sm:$0xff]
      %v299 = vld [vmem:[%s1 + $0x2e8] sm:$0xff]
      %v300 = vld [vmem:[%s1 + $0x2f0] sm:$0xff]
      %v301 = vld [vmem:[%s1 + $0x2f8] sm:$0xff]
      %v302 = vld [vmem:[%s1 + $0x300] sm:$0xff]
      %v303 = vld [vmem:[%s1 + $0x308] sm:$0xff]
      %v304 = vld [vmem:[%s1 + $0x310] sm:$0xff]
      %v305 = vld [vmem:[%s1 + $0x318] sm:$0xff]
      %v306 = vld [vmem:[%s1 + $0x320] sm:$0xff]
      %v307 = vld [vmem:[%s1 + $0x328] sm:$0xff]
      %v308 = vld [vmem:[%s1 + $0x330] sm:$0xff]
      %v309 = vld [vmem:[%s1 + $0x338] sm:$0xff]
      %v310 = vld [vmem:[%s1 + $0x340] sm:$0xff]
      %v311 = vld [vmem:[%s1 + $0x348] sm:$0xff]
      %v312 = vld [vmem:[%s1 + $0x350] sm:$0xff]
      %v313 = vld [vmem:[%s1 + $0x358] sm:$0xff]
      %v314 = vld [vmem:[%s1 + $0x360] sm:$0xff]
      %v315 = vld [vmem:[%s1 + $0x368] sm:$0xff]
      %v316 = vld [vmem:[%s1 + $0x370] sm:$0xff]
      %v317 = vld [vmem:[%s1 + $0x378] sm:$0xff]
      %v318 = vld [vmem:[%s1 + $0x380] sm:$0xff]
      %v319 = vld [vmem:[%s1 + $0x388] sm:$0xff]
      %v320 = vld [vmem:[%s1 + $0x390] sm:$0xff]
      %v321 = vld [vmem:[%s1 + $0x398] sm:$0xff]
      %v322 = vld [vmem:[%s1 + $0x3a0] sm:$0xff]
      %v323 = vld [vmem:[%s1 + $0x3a8] sm:$0xff]
      %v324 = vld [vmem:[%s1 + $0x3b0] sm:$0xff]
      %v325 = vld [vmem:[%s1 + $0x3b8] sm:$0xff]
      %v326 = vld [vmem:[%s1 + $0x3c0] sm:$0xff]
      %v327 = vld [vmem:[%s1 + $0x3c8] sm:$0xff]
      %v328 = vld [vmem:[%s1 + $0x3d0] sm:$0xff]
      %v329 = vld [vmem:[%s1 + $0x3d8] sm:$0xff]
      %v330 = vld [vmem:[%s1 + $0x3e0] sm:$0xff]
      %v331 = vld [vmem:[%s1 + $0x3e8] sm:$0xff]
      %v332 = vld [vmem:[%s1 + $0x3f0] sm:$0xff]
      %v333 = vld [vmem:[%s1 + $0x3f8] sm:$0xff]
      %334 = vmatprep.subr.mxu0 %v267
      %335 = vmatpush1.msra.mxu0 %v266
      %336 = vmatprep.subr.mxu0 %v263
      %337 = vmatpush1.msra.mxu0 %v262
      %338 = vmatprep.subr.mxu0 %v259
      %339 = vmatpush1.msra.mxu0 %v258
      %340 = vmatprep.subr.mxu0 %v255
      %341 = vmatpush1.msra.mxu0 %v254
      %342 = vmatprep.subr.mxu0 %v251
      %343 = vmatpush1.msra.mxu0 %v250
      %344 = vmatprep.subr.mxu0 %v247
      %345 = vmatpush1.msra.mxu0 %v246
      %346 = vmatprep.subr.mxu0 %v243
      %347 = vmatpush1.msra.mxu0 %v242
      %348 = vmatprep.subr.mxu0 %v239
      %349 = vmatpush1.msra.mxu0 %v238
      %350 = vmatprep.subr.mxu0 %v235
      %351 = vmatpush1.msra.mxu0 %v234
      %352 = vmatprep.subr.mxu0 %v231
      %353 = vmatpush1.msra.mxu0 %v230
      %354 = vmatprep.subr.mxu0 %v227
      %355 = vmatpush1.msra.mxu0 %v226
      %356 = vmatprep.subr.mxu0 %v223
      %357 = vmatpush1.msra.mxu0 %v222
      %358 = vmatprep.subr.mxu0 %v219
      %359 = vmatpush1.msra.mxu0 %v218
      %360 = vmatprep.subr.mxu0 %v215
      %361 = vmatpush1.msra.mxu0 %v214
      %362 = vmatprep.subr.mxu0 %v211
      %363 = vmatpush1.msra.mxu0 %v210
      %364 = vmatprep.subr.mxu0 %v207
      %365 = vmatpush1.msra.mxu0 %v206
      %366 = vmatprep.subr.mxu0 %v331
      %367 = vmatpush2.msra.mxu0 %v330
      %368 = vmatprep.subr.mxu0 %v327
      %369 = vmatpush2.msra.mxu0 %v326
      %370 = vmatprep.subr.mxu0 %v323
      %371 = vmatpush2.msra.mxu0 %v322
      %372 = vmatprep.subr.mxu0 %v319
      %373 = vmatpush2.msra.mxu0 %v318
      %374 = vmatprep.subr.mxu0 %v315
      %375 = vmatpush2.msra.mxu0 %v314
      %376 = vmatprep.subr.mxu0 %v311
      %377 = vmatpush2.msra.mxu0 %v310
      %378 = vmatprep.subr.mxu0 %v307
      %379 = vmatpush2.msra.mxu0 %v306
      %380 = vmatprep.subr.mxu0 %v303
      %381 = vmatpush2.msra.mxu0 %v302
      %382 = vmatprep.subr.mxu0 %v299
      %383 = vmatpush2.msra.mxu0 %v298
      %384 = vmatprep.subr.mxu0 %v295
      %385 = vmatpush2.msra.mxu0 %v294
      %386 = vmatprep.subr.mxu0 %v291
      %387 = vmatpush2.msra.mxu0 %v290
      %388 = vmatprep.subr.mxu0 %v287
      %389 = vmatpush2.msra.mxu0 %v286
      %390 = vmatprep.subr.mxu0 %v283
      %391 = vmatpush2.msra.mxu0 %v282
      %392 = vmatprep.subr.mxu0 %v279
      %393 = vmatpush2.msra.mxu0 %v278
      %394 = vmatprep.subr.mxu0 %v275
      %395 = vmatpush2.msra.mxu0 %v274
      %396 = vmatprep.subr.mxu0 %v271
      %397 = vmatpush2.msra.mxu0 %v270
      %398 = vmatprep.mubr.f32.mxu0 %v203
      %399 = vmatmul.mubr.f32.gmra.mxu0 %v202
      %v400 = vpop.f32.mrf.mxu0
      %v401 = vadd.f32 0.0, %v400
      %v402 = vpop.f32.mrf.mxu0
      %v403 = vadd.f32 0.0, %v402
      %404 = vmatprep.mubr.f32.mxu0 %v205
      %405 = vmatmul.mubr.f32.gmra.mxu0 %v204
      %v406 = vpop.f32.mrf.mxu0
      %v407 = vadd.f32 0.0, %v406
      %v408 = vpop.f32.mrf.mxu0
      %v409 = vadd.f32 0.0, %v408
      %410 = vdwg.mxu0
      %411 = vmatprep.subr.mxu0 %v269
      %412 = vmatpush1.msra.mxu0 %v268
      %413 = vmatprep.subr.mxu0 %v265
      %414 = vmatpush1.msra.mxu0 %v264
      %415 = vmatprep.subr.mxu0 %v261
      %416 = vmatpush1.msra.mxu0 %v260
      %417 = vmatprep.subr.mxu0 %v257
      %418 = vmatpush1.msra.mxu0 %v256
      %419 = vmatprep.subr.mxu0 %v253
      %420 = vmatpush1.msra.mxu0 %v252
      %421 = vmatprep.subr.mxu0 %v249
      %422 = vmatpush1.msra.mxu0 %v248
      %423 = vmatprep.subr.mxu0 %v245
      %424 = vmatpush1.msra.mxu0 %v244
      %425 = vmatprep.subr.mxu0 %v241
      %426 = vmatpush1.msra.mxu0 %v240
      %427 = vmatprep.subr.mxu0 %v237
      %428 = vmatpush1.msra.mxu0 %v236
      %429 = vmatprep.subr.mxu0 %v233
      %430 = vmatpush1.msra.mxu0 %v232
      %431 = vmatprep.subr.mxu0 %v229
      %432 = vmatpush1.msra.mxu0 %v228
      %433 = vmatprep.subr.mxu0 %v225
      %434 = vmatpush1.msra.mxu0 %v224
      %435 = vmatprep.subr.mxu0 %v221
      %436 = vmatpush1.msra.mxu0 %v220
      %437 = vmatprep.subr.mxu0 %v217
      %438 = vmatpush1.msra.mxu0 %v216
      %439 = vmatprep.subr.mxu0 %v213
      %440 = vmatpush1.msra.mxu0 %v212
      %441 = vmatprep.subr.mxu0 %v209
      %442 = vmatpush1.msra.mxu0 %v208
      %443 = vmatprep.subr.mxu0 %v333
      %444 = vmatpush2.msra.mxu0 %v332
      %445 = vmatprep.subr.mxu0 %v329
      %446 = vmatpush2.msra.mxu0 %v328
      %447 = vmatprep.subr.mxu0 %v325
      %448 = vmatpush2.msra.mxu0 %v324
      %449 = vmatprep.subr.mxu0 %v321
      %450 = vmatpush2.msra.mxu0 %v320
      %451 = vmatprep.subr.mxu0 %v317
      %452 = vmatpush2.msra.mxu0 %v316
      %453 = vmatprep.subr.mxu0 %v313
      %454 = vmatpush2.msra.mxu0 %v312
      %455 = vmatprep.subr.mxu0 %v309
      %456 = vmatpush2.msra.mxu0 %v308
      %457 = vmatprep.subr.mxu0 %v305
      %458 = vmatpush2.msra.mxu0 %v304
      %459 = vmatprep.subr.mxu0 %v301
      %460 = vmatpush2.msra.mxu0 %v300
      %461 = vmatprep.subr.mxu0 %v297
      %462 = vmatpush2.msra.mxu0 %v296
      %463 = vmatprep.subr.mxu0 %v293
      %464 = vmatpush2.msra.mxu0 %v292
      %465 = vmatprep.subr.mxu0 %v289
      %466 = vmatpush2.msra.mxu0 %v288
      %467 = vmatprep.subr.mxu0 %v285
      %468 = vmatpush2.msra.mxu0 %v284
      %469 = vmatprep.subr.mxu0 %v281
      %470 = vmatpush2.msra.mxu0 %v280
      %471 = vmatprep.subr.mxu0 %v277
      %472 = vmatpush2.msra.mxu0 %v276
      %473 = vmatprep.subr.mxu0 %v273
      %474 = vmatpush2.msra.mxu0 %v272
      %475 = vmatprep.mubr.f32.mxu0 %v203
      %476 = vmatmul.mubr.f32.gmra.mxu0 %v202
      %v477 = vpop.f32.mrf.mxu0
      %v478 = vadd.f32 0.0, %v477
      %v479 = vpop.f32.mrf.mxu0
      %v480 = vadd.f32 0.0, %v479
      %481 = vmatprep.mubr.f32.mxu0 %v205
      %482 = vmatmul.mubr.f32.gmra.mxu0 %v204
      %v483 = vpop.f32.mrf.mxu0
      %v484 = vadd.f32 0.0, %v483
      %v485 = vpop.f32.mrf.mxu0
      %v486 = vadd.f32 0.0, %v485
      %487 = vdwg.mxu0
      %v488 = vlaneseq
      %v489 = vshrl.u32 %v488, 7
      %v490 = vadd.s32 %v489, 8
      %vm491 = vcmp.lt.s32.totalorder %v489, 0
      %v492 = vsub.s32 0, %v489
      %v493 = vsel %vm491, %v492, %v489
      %v494 = vshrl.u32 %v493, 4
      %v495 = vand.u32 %v493, 15
      %v496 = vsub.s32 0, %v495
      %v497 = vsel %vm491, %v496, %v495
      %vm498 = vcmp.lt.s32.totalorder %v490, 0
      %v499 = vsub.s32 0, %v490
      %v500 = vsel %vm498, %v499, %v490
      %v501 = vshrl.u32 %v500, 4
      %v502 = vand.u32 %v500, 15
      %v503 = vsub.s32 0, %v502
      %v504 = vsel %vm498, %v503, %v502
      %vm505 = vcmp.ne.s32.totalorder %v497, 0
      %vm506 = vcmp.ne.s32.totalorder %v504, 0
      %vm507 = vcmp.lt.s32.totalorder %v497, 0
      %vm508 = vcmp.lt.s32.totalorder %v504, 0
      %vm509 = vmand %vm507, %vm505
      %vm510 = vmand %vm508, %vm506
      %v511 = vadd.s32 %v497, 16
      %v512 = vadd.s32 %v504, 16
      %v513 = vsel %vm509, %v511, %v497
      %v514 = vsel %vm510, %v512, %v504
      %vm515 = vcmp.ne.s32.totalorder %v513, 0
      %vm516 = vcmp.ne.s32.totalorder %v514, 0
      %vm517 = vcmp.ne.s32.totalorder %v513, 15
      %vm518 = vcmp.ne.s32.totalorder %v514, 15
      %vm519 = vcmp.gt.f32.partialorder %v401, 0.0
      %vm520 = vcmp.gt.f32.partialorder %v407, 0.0
      %v521 = vmul.f32 %v401, 0.2
      %v522 = vmul.f32 %v407, 0.2
      %v523 = vsel %vm519, %v401, %v521
      %v524 = vsel %vm520, %v407, %v522
      %v525 = vrot.slane %v523, 7
      %v526 = vrot.slane %v524, 7
      %vm527 = vcmp.lt.s32.totalorder %v489, 1
      %v528 = vsel %vm527, %v525, %v526
      %v529 = vsel %vm527, %v526, %v525
      %v530 = vsel %vm515, %v529, 0.0
      %v531 = vsel %vm516, %v528, 0.0
      %v532 = vrot.slane %v523, 1
      %v533 = vrot.slane %v524, 1
      %vm534 = vcmp.lt.s32.totalorder %v489, 7
      %v535 = vsel %vm534, %v532, %v533
      %v536 = vsel %vm534, %v533, %v532
      %v537 = vsel %vm517, %v535, 0.0
      %v538 = vsel %vm518, %v536, 0.0
      %v539 = vpack.c.bf16 %v531, %v530
      %v540 = vld [vmem:[%s2] sm:$0xf]
      %v541 = vld [vmem:[%s2 + $0x4] sm:$0xf]
      %v542 = vld [vmem:[%s2 + $0x8] sm:$0xf]
      %v543 = vld [vmem:[%s2 + $0xc] sm:$0xf]
      %v544 = vld [vmem:[%s2 + $0x10] sm:$0xf]
      %v545 = vld [vmem:[%s2 + $0x14] sm:$0xf]
      %v546 = vld [vmem:[%s2 + $0x18] sm:$0xf]
      %v547 = vld [vmem:[%s2 + $0x1c] sm:$0xf]
      %v548 = vld [vmem:[%s2 + $0x20] sm:$0xf]
      %v549 = vld [vmem:[%s2 + $0x24] sm:$0xf]
      %v550 = vld [vmem:[%s2 + $0x28] sm:$0xf]
      %v551 = vld [vmem:[%s2 + $0x2c] sm:$0xf]
      %v552 = vld [vmem:[%s2 + $0x30] sm:$0xf]
      %v553 = vld [vmem:[%s2 + $0x34] sm:$0xf]
      %v554 = vld [vmem:[%s2 + $0x38] sm:$0xf]
      %v555 = vld [vmem:[%s2 + $0x3c] sm:$0xf]
      %v556 = vpack.c.bf16 %v524, %v523
      %s557 = scalar_lea.vmem %s2, 64
      %v558 = vld [vmem:[%s557] sm:$0xf]
      %v559 = vld [vmem:[%s557 + $0x4] sm:$0xf]
      %v560 = vld [vmem:[%s557 + $0x8] sm:$0xf]
      %v561 = vld [vmem:[%s557 + $0xc] sm:$0xf]
      %v562 = vld [vmem:[%s557 + $0x10] sm:$0xf]
      %v563 = vld [vmem:[%s557 + $0x14] sm:$0xf]
      %v564 = vld [vmem:[%s557 + $0x18] sm:$0xf]
      %v565 = vld [vmem:[%s557 + $0x1c] sm:$0xf]
      %v566 = vld [vmem:[%s557 + $0x20] sm:$0xf]
      %v567 = vld [vmem:[%s557 + $0x24] sm:$0xf]
      %v568 = vld [vmem:[%s557 + $0x28] sm:$0xf]
      %v569 = vld [vmem:[%s557 + $0x2c] sm:$0xf]
      %v570 = vld [vmem:[%s557 + $0x30] sm:$0xf]
      %v571 = vld [vmem:[%s557 + $0x34] sm:$0xf]
      %v572 = vld [vmem:[%s557 + $0x38] sm:$0xf]
      %v573 = vld [vmem:[%s557 + $0x3c] sm:$0xf]
      %v590 = vunpack.c.l.b16 %v558
      %v591 = vunpack.c.l.b16 %v559
      %v592 = vunpack.c.l.b16 %v560
      %v593 = vunpack.c.l.b16 %v561
      %v594 = vunpack.c.l.b16 %v562
      %v595 = vunpack.c.l.b16 %v563
      %v596 = vunpack.c.l.b16 %v564
      %v597 = vunpack.c.l.b16 %v565
      %v598 = vunpack.c.l.b16 %v566
      %v599 = vunpack.c.l.b16 %v567
      %v600 = vunpack.c.l.b16 %v568
      %v601 = vunpack.c.l.b16 %v569
      %v602 = vunpack.c.l.b16 %v570
      %v603 = vunpack.c.l.b16 %v571
      %v604 = vunpack.c.l.b16 %v572
      %v605 = vunpack.c.l.b16 %v573
      %v606 = vpack.c.b16 %v591, %v590
      %v607 = vpack.c.b16 %v593, %v592
      %v608 = vpack.c.b16 %v595, %v594
      %v609 = vpack.c.b16 %v597, %v596
      %v610 = vpack.c.b16 %v599, %v598
      %v611 = vpack.c.b16 %v601, %v600
      %v612 = vpack.c.b16 %v603, %v602
      %v613 = vpack.c.b16 %v605, %v604
      %622 = vmatprep.subr.bf16.mxu0 0
      %623 = vmatpush1.bf16.msra.mxu0 %v613
      %624 = vmatprep.subr.bf16.mxu0 0
      %625 = vmatpush1.bf16.msra.mxu0 %v612
      %626 = vmatprep.subr.bf16.mxu0 0
      %627 = vmatpush1.bf16.msra.mxu0 %v611
      %628 = vmatprep.subr.bf16.mxu0 0
      %629 = vmatpush1.bf16.msra.mxu0 %v610
      %630 = vmatprep.subr.bf16.mxu0 0
      %631 = vmatpush1.bf16.msra.mxu0 %v609
      %632 = vmatprep.subr.bf16.mxu0 0
      %633 = vmatpush1.bf16.msra.mxu0 %v608
      %634 = vmatprep.subr.bf16.mxu0 0
      %635 = vmatpush1.bf16.msra.mxu0 %v607
      %636 = vmatprep.subr.bf16.mxu0 0
      %637 = vmatpush1.bf16.msra.mxu0 %v606
      %638 = vmatprep.subr.bf16.mxu0 0
      %639 = vmatpush2.bf16.msra.mxu0 0
      %640 = vmatprep.subr.bf16.mxu0 0
      %641 = vmatpush2.bf16.msra.mxu0 0
      %642 = vmatprep.subr.bf16.mxu0 0
      %643 = vmatpush2.bf16.msra.mxu0 0
      %644 = vmatprep.subr.bf16.mxu0 0
      %645 = vmatpush2.bf16.msra.mxu0 0
      %646 = vmatprep.subr.bf16.mxu0 0
      %647 = vmatpush2.bf16.msra.mxu0 0
      %648 = vmatprep.subr.bf16.mxu0 0
      %649 = vmatpush2.bf16.msra.mxu0 0
      %650 = vmatprep.subr.bf16.mxu0 0
      %651 = vmatpush2.bf16.msra.mxu0 0
      %652 = vmatprep.subr.bf16.mxu0 0
      %653 = vmatpush2.bf16.msra.mxu0 0
      %654 = vmatprep.mubr.bf16.mxu0 0
      %655 = vmatmul.mubr.bf16.gmra.mxu0 %v556
      %v656 = vpop.f32.mrf.mxu0
      %v657 = vadd.f32 0.0, %v656
      %v658 = vpop.f32.mrf.mxu0
      %v659 = vpop.f32.mrf.mxu0
      %v660 = vadd.f32 0.0, %v659
      %v661 = vpop.f32.mrf.mxu0
      %662 = vdwg.mxu0
      %v679 = vunpack.c.l.b16 %v540
      %v680 = vunpack.c.l.b16 %v541
      %v681 = vunpack.c.l.b16 %v542
      %v682 = vunpack.c.l.b16 %v543
      %v683 = vunpack.c.l.b16 %v544
      %v684 = vunpack.c.l.b16 %v545
      %v685 = vunpack.c.l.b16 %v546
      %v686 = vunpack.c.l.b16 %v547
      %v687 = vunpack.c.l.b16 %v548
      %v688 = vunpack.c.l.b16 %v549
      %v689 = vunpack.c.l.b16 %v550
      %v690 = vunpack.c.l.b16 %v551
      %v691 = vunpack.c.l.b16 %v552
      %v692 = vunpack.c.l.b16 %v553
      %v693 = vunpack.c.l.b16 %v554
      %v694 = vunpack.c.l.b16 %v555
      %v695 = vpack.c.b16 %v680, %v679
      %v696 = vpack.c.b16 %v682, %v681
      %v697 = vpack.c.b16 %v684, %v683
      %v698 = vpack.c.b16 %v686, %v685
      %v699 = vpack.c.b16 %v688, %v687
      %v700 = vpack.c.b16 %v690, %v689
      %v701 = vpack.c.b16 %v692, %v691
      %v702 = vpack.c.b16 %v694, %v693
      %711 = vmatprep.subr.bf16.mxu0 0
      %712 = vmatpush1.bf16.msra.mxu0 %v702
      %713 = vmatprep.subr.bf16.mxu0 0
      %714 = vmatpush1.bf16.msra.mxu0 %v701
      %715 = vmatprep.subr.bf16.mxu0 0
      %716 = vmatpush1.bf16.msra.mxu0 %v700
      %717 = vmatprep.subr.bf16.mxu0 0
      %718 = vmatpush1.bf16.msra.mxu0 %v699
      %719 = vmatprep.subr.bf16.mxu0 0
      %720 = vmatpush1.bf16.msra.mxu0 %v698
      %721 = vmatprep.subr.bf16.mxu0 0
      %722 = vmatpush1.bf16.msra.mxu0 %v697
      %723 = vmatprep.subr.bf16.mxu0 0
      %724 = vmatpush1.bf16.msra.mxu0 %v696
      %725 = vmatprep.subr.bf16.mxu0 0
      %726 = vmatpush1.bf16.msra.mxu0 %v695
      %727 = vmatprep.subr.bf16.mxu0 0
      %728 = vmatpush2.bf16.msra.mxu0 0
      %729 = vmatprep.subr.bf16.mxu0 0
      %730 = vmatpush2.bf16.msra.mxu0 0
      %731 = vmatprep.subr.bf16.mxu0 0
      %732 = vmatpush2.bf16.msra.mxu0 0
      %733 = vmatprep.subr.bf16.mxu0 0
      %734 = vmatpush2.bf16.msra.mxu0 0
      %735 = vmatprep.subr.bf16.mxu0 0
      %736 = vmatpush2.bf16.msra.mxu0 0
      %737 = vmatprep.subr.bf16.mxu0 0
      %738 = vmatpush2.bf16.msra.mxu0 0
      %739 = vmatprep.subr.bf16.mxu0 0
      %740 = vmatpush2.bf16.msra.mxu0 0
      %741 = vmatprep.subr.bf16.mxu0 0
      %742 = vmatpush2.bf16.msra.mxu0 0
      %743 = vmatprep.mubr.bf16.mxu0 0
      %744 = vmatmul.mubr.bf16.gmra.mxu0 %v539
      %v745 = vpop.f32.mrf.mxu0
      %v746 = vadd.f32 %v657, %v745
      %v747 = vpop.f32.mrf.mxu0
      %v748 = vpop.f32.mrf.mxu0
      %v749 = vadd.f32 %v660, %v748
      %v750 = vpop.f32.mrf.mxu0
      %751 = vdwg.mxu0
      %v752 = vpack.c.bf16 %v538, %v537
      %s753 = scalar_lea.vmem %s2, 128
      %v754 = vld [vmem:[%s753] sm:$0xf]
      %v755 = vld [vmem:[%s753 + $0x4] sm:$0xf]
      %v756 = vld [vmem:[%s753 + $0x8] sm:$0xf]
      %v757 = vld [vmem:[%s753 + $0xc] sm:$0xf]
      %v758 = vld [vmem:[%s753 + $0x10] sm:$0xf]
      %v759 = vld [vmem:[%s753 + $0x14] sm:$0xf]
      %v760 = vld [vmem:[%s753 + $0x18] sm:$0xf]
      %v761 = vld [vmem:[%s753 + $0x1c] sm:$0xf]
      %v762 = vld [vmem:[%s753 + $0x20] sm:$0xf]
      %v763 = vld [vmem:[%s753 + $0x24] sm:$0xf]
      %v764 = vld [vmem:[%s753 + $0x28] sm:$0xf]
      %v765 = vld [vmem:[%s753 + $0x2c] sm:$0xf]
      %v766 = vld [vmem:[%s753 + $0x30] sm:$0xf]
      %v767 = vld [vmem:[%s753 + $0x34] sm:$0xf]
      %v768 = vld [vmem:[%s753 + $0x38] sm:$0xf]
      %v769 = vld [vmem:[%s753 + $0x3c] sm:$0xf]
      %v786 = vunpack.c.l.b16 %v754
      %v787 = vunpack.c.l.b16 %v755
      %v788 = vunpack.c.l.b16 %v756
      %v789 = vunpack.c.l.b16 %v757
      %v790 = vunpack.c.l.b16 %v758
      %v791 = vunpack.c.l.b16 %v759
      %v792 = vunpack.c.l.b16 %v760
      %v793 = vunpack.c.l.b16 %v761
      %v794 = vunpack.c.l.b16 %v762
      %v795 = vunpack.c.l.b16 %v763
      %v796 = vunpack.c.l.b16 %v764
      %v797 = vunpack.c.l.b16 %v765
      %v798 = vunpack.c.l.b16 %v766
      %v799 = vunpack.c.l.b16 %v767
      %v800 = vunpack.c.l.b16 %v768
      %v801 = vunpack.c.l.b16 %v769
      %v802 = vpack.c.b16 %v787, %v786
      %v803 = vpack.c.b16 %v789, %v788
      %v804 = vpack.c.b16 %v791, %v790
      %v805 = vpack.c.b16 %v793, %v792
      %v806 = vpack.c.b16 %v795, %v794
      %v807 = vpack.c.b16 %v797, %v796
      %v808 = vpack.c.b16 %v799, %v798
      %v809 = vpack.c.b16 %v801, %v800
      %818 = vmatprep.subr.bf16.mxu0 0
      %819 = vmatpush1.bf16.msra.mxu0 %v809
      %820 = vmatprep.subr.bf16.mxu0 0
      %821 = vmatpush1.bf16.msra.mxu0 %v808
      %822 = vmatprep.subr.bf16.mxu0 0
      %823 = vmatpush1.bf16.msra.mxu0 %v807
      %824 = vmatprep.subr.bf16.mxu0 0
      %825 = vmatpush1.bf16.msra.mxu0 %v806
      %826 = vmatprep.subr.bf16.mxu0 0
      %827 = vmatpush1.bf16.msra.mxu0 %v805
      %828 = vmatprep.subr.bf16.mxu0 0
      %829 = vmatpush1.bf16.msra.mxu0 %v804
      %830 = vmatprep.subr.bf16.mxu0 0
      %831 = vmatpush1.bf16.msra.mxu0 %v803
      %832 = vmatprep.subr.bf16.mxu0 0
      %833 = vmatpush1.bf16.msra.mxu0 %v802
      %834 = vmatprep.subr.bf16.mxu0 0
      %835 = vmatpush2.bf16.msra.mxu0 0
      %836 = vmatprep.subr.bf16.mxu0 0
      %837 = vmatpush2.bf16.msra.mxu0 0
      %838 = vmatprep.subr.bf16.mxu0 0
      %839 = vmatpush2.bf16.msra.mxu0 0
      %840 = vmatprep.subr.bf16.mxu0 0
      %841 = vmatpush2.bf16.msra.mxu0 0
      %842 = vmatprep.subr.bf16.mxu0 0
      %843 = vmatpush2.bf16.msra.mxu0 0
      %844 = vmatprep.subr.bf16.mxu0 0
      %845 = vmatpush2.bf16.msra.mxu0 0
      %846 = vmatprep.subr.bf16.mxu0 0
      %847 = vmatpush2.bf16.msra.mxu0 0
      %848 = vmatprep.subr.bf16.mxu0 0
      %849 = vmatpush2.bf16.msra.mxu0 0
      %850 = vmatprep.mubr.bf16.mxu0 0
      %851 = vmatmul.mubr.bf16.gmra.mxu0 %v752
      %v852 = vpop.f32.mrf.mxu0
      %v853 = vadd.f32 0.0, %v852
      %v854 = vpop.f32.mrf.mxu0
      %v855 = vpop.f32.mrf.mxu0
      %v856 = vadd.f32 0.0, %v855
      %v857 = vpop.f32.mrf.mxu0
      %858 = vdwg.mxu0
      %v859 = vadd.f32 %v746, %v853
      %v860 = vadd.f32 %v749, %v856
      %v861 = vadd.f32 %v859, %v403
      %v862 = vadd.f32 %v860, %v409
      %vm863 = vcmp.gt.f32.partialorder %v861, 0.0
      %vm864 = vcmp.gt.f32.partialorder %v862, 0.0
      %v865 = vmul.f32 %v861, 0.2
      %v866 = vmul.f32 %v862, 0.2
      %v867 = vsel %vm863, %v861, %v865
      %v868 = vsel %vm864, %v862, %v866
      %v869 = vrot.slane %v867, 7
      %v870 = vrot.slane %v868, 7
      %v871 = vsel %vm527, %v869, %v870
      %v872 = vsel %vm527, %v870, %v869
      %v873 = vsel %vm515, %v872, 0.0
      %v874 = vsel %vm516, %v871, 0.0
      %v875 = vrot.slane %v867, 1
      %v876 = vrot.slane %v868, 1
      %v877 = vsel %vm534, %v875, %v876
      %v878 = vsel %vm534, %v876, %v875
      %v879 = vsel %vm517, %v877, 0.0
      %v880 = vsel %vm518, %v878, 0.0
      %v881 = vpack.c.bf16 %v874, %v873
      %s882 = scalar_lea.vmem %s2, 192
      %v883 = vld [vmem:[%s882] sm:$0xf]
      %v884 = vld [vmem:[%s882 + $0x4] sm:$0xf]
      %v885 = vld [vmem:[%s882 + $0x8] sm:$0xf]
      %v886 = vld [vmem:[%s882 + $0xc] sm:$0xf]
      %v887 = vld [vmem:[%s882 + $0x10] sm:$0xf]
      %v888 = vld [vmem:[%s882 + $0x14] sm:$0xf]
      %v889 = vld [vmem:[%s882 + $0x18] sm:$0xf]
      %v890 = vld [vmem:[%s882 + $0x1c] sm:$0xf]
      %v891 = vld [vmem:[%s882 + $0x20] sm:$0xf]
      %v892 = vld [vmem:[%s882 + $0x24] sm:$0xf]
      %v893 = vld [vmem:[%s882 + $0x28] sm:$0xf]
      %v894 = vld [vmem:[%s882 + $0x2c] sm:$0xf]
      %v895 = vld [vmem:[%s882 + $0x30] sm:$0xf]
      %v896 = vld [vmem:[%s882 + $0x34] sm:$0xf]
      %v897 = vld [vmem:[%s882 + $0x38] sm:$0xf]
      %v898 = vld [vmem:[%s882 + $0x3c] sm:$0xf]
      %v899 = vpack.c.bf16 %v868, %v867
      %s900 = scalar_lea.vmem %s2, 256
      %v901 = vld [vmem:[%s900] sm:$0xf]
      %v902 = vld [vmem:[%s900 + $0x4] sm:$0xf]
      %v903 = vld [vmem:[%s900 + $0x8] sm:$0xf]
      %v904 = vld [vmem:[%s900 + $0xc] sm:$0xf]
      %v905 = vld [vmem:[%s900 + $0x10] sm:$0xf]
      %v906 = vld [vmem:[%s900 + $0x14] sm:$0xf]
      %v907 = vld [vmem:[%s900 + $0x18] sm:$0xf]
      %v908 = vld [vmem:[%s900 + $0x1c] sm:$0xf]
      %v909 = vld [vmem:[%s900 + $0x20] sm:$0xf]
      %v910 = vld [vmem:[%s900 + $0x24] sm:$0xf]
      %v911 = vld [vmem:[%s900 + $0x28] sm:$0xf]
      %v912 = vld [vmem:[%s900 + $0x2c] sm:$0xf]
      %v913 = vld [vmem:[%s900 + $0x30] sm:$0xf]
      %v914 = vld [vmem:[%s900 + $0x34] sm:$0xf]
      %v915 = vld [vmem:[%s900 + $0x38] sm:$0xf]
      %v916 = vld [vmem:[%s900 + $0x3c] sm:$0xf]
      %v933 = vunpack.c.l.b16 %v901
      %v934 = vunpack.c.l.b16 %v902
      %v935 = vunpack.c.l.b16 %v903
      %v936 = vunpack.c.l.b16 %v904
      %v937 = vunpack.c.l.b16 %v905
      %v938 = vunpack.c.l.b16 %v906
      %v939 = vunpack.c.l.b16 %v907
      %v940 = vunpack.c.l.b16 %v908
      %v941 = vunpack.c.l.b16 %v909
      %v942 = vunpack.c.l.b16 %v910
      %v943 = vunpack.c.l.b16 %v911
      %v944 = vunpack.c.l.b16 %v912
      %v945 = vunpack.c.l.b16 %v913
      %v946 = vunpack.c.l.b16 %v914
      %v947 = vunpack.c.l.b16 %v915
      %v948 = vunpack.c.l.b16 %v916
      %v949 = vpack.c.b16 %v934, %v933
      %v950 = vpack.c.b16 %v936, %v935
      %v951 = vpack.c.b16 %v938, %v937
      %v952 = vpack.c.b16 %v940, %v939
      %v953 = vpack.c.b16 %v942, %v941
      %v954 = vpack.c.b16 %v944, %v943
      %v955 = vpack.c.b16 %v946, %v945
      %v956 = vpack.c.b16 %v948, %v947
      %965 = vmatprep.subr.bf16.mxu0 0
      %966 = vmatpush1.bf16.msra.mxu0 %v956
      %967 = vmatprep.subr.bf16.mxu0 0
      %968 = vmatpush1.bf16.msra.mxu0 %v955
      %969 = vmatprep.subr.bf16.mxu0 0
      %970 = vmatpush1.bf16.msra.mxu0 %v954
      %971 = vmatprep.subr.bf16.mxu0 0
      %972 = vmatpush1.bf16.msra.mxu0 %v953
      %973 = vmatprep.subr.bf16.mxu0 0
      %974 = vmatpush1.bf16.msra.mxu0 %v952
      %975 = vmatprep.subr.bf16.mxu0 0
      %976 = vmatpush1.bf16.msra.mxu0 %v951
      %977 = vmatprep.subr.bf16.mxu0 0
      %978 = vmatpush1.bf16.msra.mxu0 %v950
      %979 = vmatprep.subr.bf16.mxu0 0
      %980 = vmatpush1.bf16.msra.mxu0 %v949
      %981 = vmatprep.subr.bf16.mxu0 0
      %982 = vmatpush2.bf16.msra.mxu0 0
      %983 = vmatprep.subr.bf16.mxu0 0
      %984 = vmatpush2.bf16.msra.mxu0 0
      %985 = vmatprep.subr.bf16.mxu0 0
      %986 = vmatpush2.bf16.msra.mxu0 0
      %987 = vmatprep.subr.bf16.mxu0 0
      %988 = vmatpush2.bf16.msra.mxu0 0
      %989 = vmatprep.subr.bf16.mxu0 0
      %990 = vmatpush2.bf16.msra.mxu0 0
      %991 = vmatprep.subr.bf16.mxu0 0
      %992 = vmatpush2.bf16.msra.mxu0 0
      %993 = vmatprep.subr.bf16.mxu0 0
      %994 = vmatpush2.bf16.msra.mxu0 0
      %995 = vmatprep.subr.bf16.mxu0 0
      %996 = vmatpush2.bf16.msra.mxu0 0
      %997 = vmatprep.mubr.bf16.mxu0 0
      %998 = vmatmul.mubr.bf16.gmra.mxu0 %v899
      %v999 = vpop.f32.mrf.mxu0
      %v1000 = vadd.f32 0.0, %v999
      %v1001 = vpop.f32.mrf.mxu0
      %v1002 = vpop.f32.mrf.mxu0
      %v1003 = vadd.f32 0.0, %v1002
      %v1004 = vpop.f32.mrf.mxu0
      %1005 = vdwg.mxu0
      %v1022 = vunpack.c.l.b16 %v883
      %v1023 = vunpack.c.l.b16 %v884
      %v1024 = vunpack.c.l.b16 %v885
      %v1025 = vunpack.c.l.b16 %v886
      %v1026 = vunpack.c.l.b16 %v887
      %v1027 = vunpack.c.l.b16 %v888
      %v1028 = vunpack.c.l.b16 %v889
      %v1029 = vunpack.c.l.b16 %v890
      %v1030 = vunpack.c.l.b16 %v891
      %v1031 = vunpack.c.l.b16 %v892
      %v1032 = vunpack.c.l.b16 %v893
      %v1033 = vunpack.c.l.b16 %v894
      %v1034 = vunpack.c.l.b16 %v895
      %v1035 = vunpack.c.l.b16 %v896
      %v1036 = vunpack.c.l.b16 %v897
      %v1037 = vunpack.c.l.b16 %v898
      %v1038 = vpack.c.b16 %v1023, %v1022
      %v1039 = vpack.c.b16 %v1025, %v1024
      %v1040 = vpack.c.b16 %v1027, %v1026
      %v1041 = vpack.c.b16 %v1029, %v1028
      %v1042 = vpack.c.b16 %v1031, %v1030
      %v1043 = vpack.c.b16 %v1033, %v1032
      %v1044 = vpack.c.b16 %v1035, %v1034
      %v1045 = vpack.c.b16 %v1037, %v1036
      %1054 = vmatprep.subr.bf16.mxu0 0
      %1055 = vmatpush1.bf16.msra.mxu0 %v1045
      %1056 = vmatprep.subr.bf16.mxu0 0
      %1057 = vmatpush1.bf16.msra.mxu0 %v1044
      %1058 = vmatprep.subr.bf16.mxu0 0
      %1059 = vmatpush1.bf16.msra.mxu0 %v1043
      %1060 = vmatprep.subr.bf16.mxu0 0
      %1061 = vmatpush1.bf16.msra.mxu0 %v1042
      %1062 = vmatprep.subr.bf16.mxu0 0
      %1063 = vmatpush1.bf16.msra.mxu0 %v1041
      %1064 = vmatprep.subr.bf16.mxu0 0
      %1065 = vmatpush1.bf16.msra.mxu0 %v1040
      %1066 = vmatprep.subr.bf16.mxu0 0
      %1067 = vmatpush1.bf16.msra.mxu0 %v1039
      %1068 = vmatprep.subr.bf16.mxu0 0
      %1069 = vmatpush1.bf16.msra.mxu0 %v1038
      %1070 = vmatprep.subr.bf16.mxu0 0
      %1071 = vmatpush2.bf16.msra.mxu0 0
      %1072 = vmatprep.subr.bf16.mxu0 0
      %1073 = vmatpush2.bf16.msra.mxu0 0
      %1074 = vmatprep.subr.bf16.mxu0 0
      %1075 = vmatpush2.bf16.msra.mxu0 0
      %1076 = vmatprep.subr.bf16.mxu0 0
      %1077 = vmatpush2.bf16.msra.mxu0 0
      %1078 = vmatprep.subr.bf16.mxu0 0
      %1079 = vmatpush2.bf16.msra.mxu0 0
      %1080 = vmatprep.subr.bf16.mxu0 0
      %1081 = vmatpush2.bf16.msra.mxu0 0
      %1082 = vmatprep.subr.bf16.mxu0 0
      %1083 = vmatpush2.bf16.msra.mxu0 0
      %1084 = vmatprep.subr.bf16.mxu0 0
      %1085 = vmatpush2.bf16.msra.mxu0 0
      %1086 = vmatprep.mubr.bf16.mxu0 0
      %1087 = vmatmul.mubr.bf16.gmra.mxu0 %v881
      %v1088 = vpop.f32.mrf.mxu0
      %v1089 = vadd.f32 %v1000, %v1088
      %v1090 = vpop.f32.mrf.mxu0
      %v1091 = vpop.f32.mrf.mxu0
      %v1092 = vadd.f32 %v1003, %v1091
      %v1093 = vpop.f32.mrf.mxu0
      %1094 = vdwg.mxu0
      %v1095 = vpack.c.bf16 %v880, %v879
      %s1096 = scalar_lea.vmem %s2, 320
      %v1097 = vld [vmem:[%s1096] sm:$0xf]
      %v1098 = vld [vmem:[%s1096 + $0x4] sm:$0xf]
      %v1099 = vld [vmem:[%s1096 + $0x8] sm:$0xf]
      %v1100 = vld [vmem:[%s1096 + $0xc] sm:$0xf]
      %v1101 = vld [vmem:[%s1096 + $0x10] sm:$0xf]
      %v1102 = vld [vmem:[%s1096 + $0x14] sm:$0xf]
      %v1103 = vld [vmem:[%s1096 + $0x18] sm:$0xf]
      %v1104 = vld [vmem:[%s1096 + $0x1c] sm:$0xf]
      %v1105 = vld [vmem:[%s1096 + $0x20] sm:$0xf]
      %v1106 = vld [vmem:[%s1096 + $0x24] sm:$0xf]
      %v1107 = vld [vmem:[%s1096 + $0x28] sm:$0xf]
      %v1108 = vld [vmem:[%s1096 + $0x2c] sm:$0xf]
      %v1109 = vld [vmem:[%s1096 + $0x30] sm:$0xf]
      %v1110 = vld [vmem:[%s1096 + $0x34] sm:$0xf]
      %v1111 = vld [vmem:[%s1096 + $0x38] sm:$0xf]
      %v1112 = vld [vmem:[%s1096 + $0x3c] sm:$0xf]
      %v1129 = vunpack.c.l.b16 %v1097
      %v1130 = vunpack.c.l.b16 %v1098
      %v1131 = vunpack.c.l.b16 %v1099
      %v1132 = vunpack.c.l.b16 %v1100
      %v1133 = vunpack.c.l.b16 %v1101
      %v1134 = vunpack.c.l.b16 %v1102
      %v1135 = vunpack.c.l.b16 %v1103
      %v1136 = vunpack.c.l.b16 %v1104
      %v1137 = vunpack.c.l.b16 %v1105
      %v1138 = vunpack.c.l.b16 %v1106
      %v1139 = vunpack.c.l.b16 %v1107
      %v1140 = vunpack.c.l.b16 %v1108
      %v1141 = vunpack.c.l.b16 %v1109
      %v1142 = vunpack.c.l.b16 %v1110
      %v1143 = vunpack.c.l.b16 %v1111
      %v1144 = vunpack.c.l.b16 %v1112
      %v1145 = vpack.c.b16 %v1130, %v1129
      %v1146 = vpack.c.b16 %v1132, %v1131
      %v1147 = vpack.c.b16 %v1134, %v1133
      %v1148 = vpack.c.b16 %v1136, %v1135
      %v1149 = vpack.c.b16 %v1138, %v1137
      %v1150 = vpack.c.b16 %v1140, %v1139
      %v1151 = vpack.c.b16 %v1142, %v1141
      %v1152 = vpack.c.b16 %v1144, %v1143
      %1161 = vmatprep.subr.bf16.mxu0 0
      %1162 = vmatpush1.bf16.msra.mxu0 %v1152
      %1163 = vmatprep.subr.bf16.mxu0 0
      %1164 = vmatpush1.bf16.msra.mxu0 %v1151
      %1165 = vmatprep.subr.bf16.mxu0 0
      %1166 = vmatpush1.bf16.msra.mxu0 %v1150
      %1167 = vmatprep.subr.bf16.mxu0 0
      %1168 = vmatpush1.bf16.msra.mxu0 %v1149
      %1169 = vmatprep.subr.bf16.mxu0 0
      %1170 = vmatpush1.bf16.msra.mxu0 %v1148
      %1171 = vmatprep.subr.bf16.mxu0 0
      %1172 = vmatpush1.bf16.msra.mxu0 %v1147
      %1173 = vmatprep.subr.bf16.mxu0 0
      %1174 = vmatpush1.bf16.msra.mxu0 %v1146
      %1175 = vmatprep.subr.bf16.mxu0 0
      %1176 = vmatpush1.bf16.msra.mxu0 %v1145
      %1177 = vmatprep.subr.bf16.mxu0 0
      %1178 = vmatpush2.bf16.msra.mxu0 0
      %1179 = vmatprep.subr.bf16.mxu0 0
      %1180 = vmatpush2.bf16.msra.mxu0 0
      %1181 = vmatprep.subr.bf16.mxu0 0
      %1182 = vmatpush2.bf16.msra.mxu0 0
      %1183 = vmatprep.subr.bf16.mxu0 0
      %1184 = vmatpush2.bf16.msra.mxu0 0
      %1185 = vmatprep.subr.bf16.mxu0 0
      %1186 = vmatpush2.bf16.msra.mxu0 0
      %1187 = vmatprep.subr.bf16.mxu0 0
      %1188 = vmatpush2.bf16.msra.mxu0 0
      %1189 = vmatprep.subr.bf16.mxu0 0
      %1190 = vmatpush2.bf16.msra.mxu0 0
      %1191 = vmatprep.subr.bf16.mxu0 0
      %1192 = vmatpush2.bf16.msra.mxu0 0
      %1193 = vmatprep.mubr.bf16.mxu0 0
      %1194 = vmatmul.mubr.bf16.gmra.mxu0 %v1095
      %v1195 = vpop.f32.mrf.mxu0
      %v1196 = vadd.f32 0.0, %v1195
      %v1197 = vpop.f32.mrf.mxu0
      %v1198 = vpop.f32.mrf.mxu0
      %v1199 = vadd.f32 0.0, %v1198
      %v1200 = vpop.f32.mrf.mxu0
      %1201 = vdwg.mxu0
      %v1202 = vadd.f32 %v1089, %v1196
      %v1203 = vadd.f32 %v1092, %v1199
      %v1204 = vadd.f32 %v1202, %v478
      %v1205 = vadd.f32 %v1203, %v484
      %vm1206 = vcmp.gt.f32.partialorder %v1204, 0.0
      %vm1207 = vcmp.gt.f32.partialorder %v1205, 0.0
      %v1208 = vmul.f32 %v1204, 0.2
      %v1209 = vmul.f32 %v1205, 0.2
      %v1210 = vsel %vm1206, %v1204, %v1208
      %v1211 = vsel %vm1207, %v1205, %v1209
      %v1212 = vld [vmem:[%s3] sm:$0xff]
      %v1213 = vld [vmem:[%s3 + $0x8] sm:$0xff]
      %v1214 = vmul.f32 %v1210, %v1212
      %v1215 = vmul.f32 %v1211, %v1213
      %v1216 = vadd.f32 %v1214, %v1215
      %1217 = vadd.xlane.f32.xlu0 %v1216
      %v1218 = vpop.xlane.xlu0 %1217
      %v1219 = vrot.slane %v1218, 4
      %v1220 = vadd.f32 %v1218, %v1219
      %v1221 = vrot.slane %v1220, 2
      %v1222 = vadd.f32 %v1220, %v1221
      %v1223 = vrot.slane %v1222, 1
      %v1224 = vadd.f32 %v1222, %v1223
      %s1225 = vtos %v1224
      %v1226 = vand.u32 2147483647, %v480
      %v1227 = vand.u32 2147483647, %v486
      %v1228 = vadd.f32 %v1226, %v1227
      %1229 = vadd.xlane.f32.xlu0 %v1228
      %v1230 = vpop.xlane.xlu0 %1229
      %v1231 = vrot.slane %v1230, 4
      %v1232 = vadd.f32 %v1230, %v1231
      %v1233 = vrot.slane %v1232, 2
      %v1234 = vadd.f32 %v1232, %v1233
      %v1235 = vrot.slane %v1234, 1
      %v1236 = vadd.f32 %v1234, %v1235
      %s1237 = vtos %v1236
      %v1238 = vmul.f32 %v202, %v202
      %v1239 = vmul.f32 %v204, %v204
      %1242 = vrot.lane.b32.xlu0 %v1238, 64
      %v1243 = vpop.permute.xlu0 %1242
      %1244 = vrot.lane.b32.xlu0 %v1239, 64
      %v1245 = vpop.permute.xlu0 %1244
      %vm1248 = vcmask 130048
      %v1249 = vsel %vm1248, %v1243, 0.0
      %v1250 = vsel %vm1248, %v1245, 0.0
      %v1251 = vadd.f32 %v1249, %v1250
      %1252 = vadd.xlane.f32.xlu0 %v1251
      %v1253 = vpop.xlane.xlu0 %1252
      %v1254 = vrot.slane %v1253, 4
      %v1255 = vadd.f32 %v1253, %v1254
      %v1256 = vrot.slane %v1255, 2
      %v1257 = vadd.f32 %v1255, %v1256
      %v1258 = vrot.slane %v1257, 1
      %v1259 = vadd.f32 %v1257, %v1258
      %s1260 = vtos %v1259
      %v1261 = vlaneseq
      %v1262 = vand.u32 %v1261, 127
      %vm1263 = vcmp.eq.s32.totalorder %v1262, 0
      %vm1264 = vcmp.eq.s32.totalorder %v1262, 1
      %vm1265 = vcmp.eq.s32.totalorder %v1262, 2
      %v1266 = vstv %s1260
      %v1267 = vsel %vm1265, %v1266, 0.0
      %v1268 = vstv %s1237
      %v1269 = vsel %vm1264, %v1268, %v1267
      %v1270 = vstv %s1225
      %v1271 = vsel %vm1263, %v1270, %v1269
      %vm1272 = vcmp.eq.s32.totalorder %v489, 0
      %v1273 = vsel %vm1272, %v1271, 0.0
      %1274 = vst [vmem:[%s200] sm:$0xff] %v1273
      %p1275 = scmp.lt.s32.totalorder %s15, 1
      %s1276 = scalar_select %p1275, %s15, 1
      %s1277 = smul.addr %s1276, 8
      %s1278 = scalar_lea.vmem %s4, %s1277
      // Predicated region
      $region37: #{wrapper_forward.1} parent=35 // pred_check
        %p1279 = pneg %p122
      $region38: #{wrapper_forward.1} parent=35 // pred_check_branch
        %1281 = sbr.rel (%p1279) target = $region40
      $region39: #{wrapper_forward.1} parent=35 // pred_region
        _
      $region40: #{wrapper_forward.1} parent=35 // pred_fallthru
        _
    $region36: #{wrapper_forward.1} parent=5 // pred_fallthru
      _
    %p1282 = scmp.le.s32.totalorder 2, %s10
    // Predicated region
    $region41: #{wrapper_forward.1} parent=5 // pred_check
      %p1283 = pneg %p1282
    $region42: #{wrapper_forward.1} parent=5 // pred_check_branch
      %1285 = sbr.rel (%p1283) target = $region44
    $region43: #{wrapper_forward.1} parent=5 // pred_region
      %s1286 = ssub.s32 %s10, 2
      // Predicated region
      $region45: #{wrapper_forward.1} parent=43 // pred_check
        %p1287 = pneg %p128
      $region46: #{wrapper_forward.1} parent=43 // pred_check_branch
        %1289 = sbr.rel (%p1287) target = $region48
      $region47: #{wrapper_forward.1} parent=43 // pred_region
        %p1290 = scmp.lt.s32.totalorder %s16, 1
        %s1291 = scalar_select %p1290, %s16, 1
        %s1292 = smul.addr %s1291, 8
        %s1293 = scalar_lea.vmem %s4, %s1292
      $region48: #{wrapper_forward.1} parent=43 // pred_fallthru
        _
    $region44: #{wrapper_forward.1} parent=5 // pred_fallthru
      _
  $region6: #{wrapper_forward.1} parent=0 // loop_footer
    %s14 = sadd.s32 1, %s10
  $region7: #{wrapper_forward.1} parent=0 // loop_footer_branch
    %9 = sbr.rel target = $region3
  $region8: #{wrapper_forward.1} parent=0 // loop_exit
    _

</llo_original>
